<compile_context>
chip_gen: v6e
topology: v6e:2x2x1
jax: 0.10.0
libtpu: 0.0.40
codegen_flags: <defaults>
</compile_context>

<pallas_src>
import functools

import jax
import jax.numpy as jnp
from jax.experimental import pallas as pl
from jax.experimental.pallas import tpu as pltpu


def _unet_out_kernel(x_ref, gamma_ref, beta_ref, grp_ref, grpT_ref, w_ref, b_ref,
                     o_ref, *, H, W, C, Cp, G, eps):
    # x_ref:     (1, C, H*W)  one batch element, channels on sublanes, spatial on lanes
    # gamma_ref: (C, 1)       groupnorm scale
    # beta_ref:  (C, 1)       groupnorm shift
    # grp_ref:   (C, G)       one-hot channel->group matrix
    # grpT_ref:  (G, C)       its transpose (precomputed in the wrapper)
    # w_ref:     (9*Cp, C)    conv weights, tap-major, Cout padded to Cp=8, bf16
    # b_ref:     (Cp, 1)      conv bias, padded to Cp
    # o_ref:     (1, Cp, H*W) lane-dense, Cout padded to Cp
    HW = H * W
    x = x_ref[0].astype(jnp.float32)                              # (C, HW)
    inv_n = 1.0 / float(HW * (C // G))

    # ---- GroupNorm statistics: centered two-pass variance, column-oriented ----
    s_col = jnp.sum(x, axis=1, keepdims=True)                     # (C, 1) per-channel sums
    mean_g = jnp.dot(grpT_ref[...], s_col,
                     preferred_element_type=jnp.float32) * inv_n  # (G, 1)
    mean_c = jnp.dot(grp_ref[...], mean_g,
                     preferred_element_type=jnp.float32)          # (C, 1)
    d = x - mean_c                                                # centered; x dead here
    ssq_col = jnp.sum(d * d, axis=1, keepdims=True)               # (C, 1)
    var_g = jnp.dot(grpT_ref[...], ssq_col,
                    preferred_element_type=jnp.float32) * inv_n   # (G, 1)
    inv_g = jax.lax.rsqrt(var_g + eps)                            # (G, 1)
    inv_c = jnp.dot(grp_ref[...], inv_g,
                    preferred_element_type=jnp.float32)           # (C, 1)

    a = d * (inv_c * gamma_ref[...]) + beta_ref[...]              # (C, HW); d dead here
    # ---- SiLU: exp + approx-reciprocal keep both transcendentals on the EUP ----
    e = jnp.exp(-a)
    sig = pl.reciprocal(1.0 + e, approx=True)
    a = (a * sig).astype(jnp.bfloat16)                            # MXU operand; f32 a dead

    # ---- 3x3 same-padding conv: one tap-packed matmul + 8 shifted/masked adds ----
    r = jnp.dot(w_ref[...], a, preferred_element_type=jnp.float32)  # (9*Cp, HW)

    lane = jax.lax.broadcasted_iota(jnp.int32, (1, HW), 1)        # flattened spatial idx p
    col = lane % W                                                # w = p mod W
    row_ok = {-1: lane >= W, 0: None, 1: lane < HW - W}
    col_ok = {-1: col >= 1, 0: None, 1: col <= W - 2}

    acc = r[4 * Cp:5 * Cp, :]                                     # center tap: no shift/mask
    for kh in range(3):
        for kw in range(3):
            if kh == 1 and kw == 1:
                continue
            dh, dw = kh - 1, kw - 1
            tap = kh * 3 + kw
            rt = r[tap * Cp:(tap + 1) * Cp, :]                    # (Cp, HW), aligned slice
            shift = dh * W + dw                                   # static lane shift
            # want shifted[:, p] = rt[:, p + shift]  ==  jnp.roll(rt, -shift, axis=1)
            rt = pltpu.roll(rt, (-shift) % HW, 1)
            m = row_ok[dh]
            if col_ok[dw] is not None:
                m = col_ok[dw] if m is None else m & col_ok[dw]
            rt = jnp.where(m, rt, 0.0)                            # kill wrapped / OOB taps
            acc = acc + rt

    o_ref[0] = (acc + b_ref[...]).astype(o_ref.dtype)             # (Cp, HW), full-tile store


def _vmem_limit_bytes():
    # Generation-aware limit: ~48 MiB on v7x (64 MiB physical/TC), 64 MiB on v5e/v6e.
    limit = 64 * 1024 * 1024
    try:
        cap = int(pltpu.get_tpu_info().vmem_capacity_bytes)
        limit = min(limit, (3 * cap) // 4)
    except Exception:
        pass
    return limit


def unet_output_layer(x_nchw, gamma, beta, w_oihw, bias, *, groups=32, eps=1e-5):
    """GroupNorm(32) -> SiLU -> Conv2d(3x3, pad=1). Input/output are NCHW (PyTorch)."""
    N, C, H, W = x_nchw.shape
    Cout = w_oihw.shape[0]
    G = groups
    assert C % G == 0
    HW = H * W
    Cp = ((Cout + 7) // 8) * 8                                    # pad taps/out to 8 sublanes

    x3 = x_nchw.reshape(N, C, HW)                                 # free reshape, dtype kept
    gamma2 = gamma.reshape(C, 1).astype(jnp.float32)
    beta2 = beta.reshape(C, 1).astype(jnp.float32)
    grp = (jnp.arange(C)[:, None] // (C // G)
           == jnp.arange(G)[None, :]).astype(jnp.float32)         # (C, G) one-hot
    grpT = grp.T                                                  # (G, C) precomputed

    # (Cout, Cin, 3, 3) -> (3, 3, Cout, Cin) -> pad Cout->Cp -> (9*Cp, Cin), bf16
    w_t = jnp.transpose(w_oihw, (2, 3, 0, 1))
    w_t = jnp.pad(w_t, ((0, 0), (0, 0), (0, Cp - Cout), (0, 0)))
    w2 = w_t.reshape(9 * Cp, C).astype(jnp.bfloat16)
    b2 = jnp.pad(bias.astype(jnp.float32), (0, Cp - Cout)).reshape(Cp, 1)

    kernel = functools.partial(_unet_out_kernel, H=H, W=W, C=C, Cp=Cp, G=G, eps=eps)

    out = pl.pallas_call(
        kernel,
        out_shape=jax.ShapeDtypeStruct((N, Cp, HW), jnp.float32),
        grid_spec=pltpu.PrefetchScalarGridSpec(
            num_scalar_prefetch=0,
            grid=(N,),
            in_specs=[
                pl.BlockSpec((1, C, HW), lambda n: (n, 0, 0)),
                pl.BlockSpec((C, 1), lambda n: (0, 0)),
                pl.BlockSpec((C, 1), lambda n: (0, 0)),
                pl.BlockSpec((C, G), lambda n: (0, 0)),
                pl.BlockSpec((G, C), lambda n: (0, 0)),
                pl.BlockSpec((9 * Cp, C), lambda n: (0, 0)),
                pl.BlockSpec((Cp, 1), lambda n: (0, 0)),
            ],
            out_specs=pl.BlockSpec((1, Cp, HW), lambda n: (n, 0, 0)),
        ),
        compiler_params=pltpu.CompilerParams(
            dimension_semantics=("parallel",),
            vmem_limit_bytes=_vmem_limit_bytes()),
    )(x3, gamma2, beta2, grp, grpT, w2, b2)

    return out[:, :Cout, :].reshape(N, Cout, H, W)


def _reference(x, gamma, beta, w_oihw, bias, groups=32, eps=1e-5):
    N, C, H, W = x.shape
    xg = x.reshape(N, groups, -1)
    mean = xg.mean(axis=2, keepdims=True)
    var = xg.var(axis=2, keepdims=True)
    xn = ((xg - mean) / jnp.sqrt(var + eps)).reshape(N, C, H, W)
    xn = xn * gamma[None, :, None, None] + beta[None, :, None, None]
    a = xn * jax.nn.sigmoid(xn)
    out = jax.lax.conv_general_dilated(
        a, w_oihw, window_strides=(1, 1), padding="SAME",
        dimension_numbers=("NCHW", "OIHW", "NCHW"),
        precision=jax.lax.Precision.HIGHEST)
    return out + bias[None, :, None, None]


if __name__ == "__main__":
    # Small shapes consistent with the module: in_channels must be divisible by 32.
    N, Cin, Cout, H, W = 2, 64, 4, 16, 16

    key = jax.random.PRNGKey(0)
    kx, kg, kb, kw, kbias = jax.random.split(key, 5)
    x = jax.random.normal(kx, (N, Cin, H, W), jnp.float32)
    gamma = 1.0 + 0.1 * jax.random.normal(kg, (Cin,), jnp.float32)
    beta = 0.1 * jax.random.normal(kb, (Cin,), jnp.float32)
    w_oihw = 0.05 * jax.random.normal(kw, (Cout, Cin, 3, 3), jnp.float32)
    bias = 0.1 * jax.random.normal(kbias, (Cout,), jnp.float32)

    out = unet_output_layer(x, gamma, beta, w_oihw, bias)
    out = jax.block_until_ready(out)
    ref = _reference(x, gamma, beta, w_oihw, bias)
    assert out.shape == (N, Cout, H, W)
    # Tolerance sized for bf16 MXU operands + approx-reciprocal sigmoid (f32 acc);
    # structural bugs (wrong shift/mask/normalization) produce O(1) errors.
    assert jnp.max(jnp.abs(out - ref)) < 3e-2, "mismatch vs reference"

    # Tap-isolating structured-weight test: pins the conv shift+mask (border) logic.
    w_iso = jnp.zeros((Cout, Cin, 3, 3), jnp.float32).at[0, 0, 0, 0].set(1.0)
    b_iso = jnp.zeros((Cout,), jnp.float32)
    out_iso = jax.block_until_ready(unet_output_layer(x, gamma, beta, w_iso, b_iso))
    ref_iso = _reference(x, gamma, beta, w_iso, b_iso)
    assert jnp.max(jnp.abs(out_iso - ref_iso)) < 2e-2, "tap/border mismatch vs reference"

    print("KERNEL_OK")
</pallas_src>

<mosaic_0001>
module attributes {stable_mosaic.version = 11 : i64} {
  func.func @_unet_out_kernel(%arg0: i32, %arg1: memref<1x64x256xf32, #tpu.memory_space<vmem>>, %arg2: memref<64x1xf32, #tpu.memory_space<vmem>>, %arg3: memref<64x1xf32, #tpu.memory_space<vmem>>, %arg4: memref<64x32xf32, #tpu.memory_space<vmem>>, %arg5: memref<32x64xf32, #tpu.memory_space<vmem>>, %arg6: memref<72x64xbf16, #tpu.memory_space<vmem>>, %arg7: memref<8x1xf32, #tpu.memory_space<vmem>>, %arg8: memref<1x8x256xf32, #tpu.memory_space<vmem>>) attributes {dimension_semantics = [#tpu.dimension_semantics<parallel>], iteration_bounds = array<i64: 2>, scalar_prefetch = 0 : i64, scratch_operands = 0 : i64, tpu.core_type = #tpu.core_type<tc>, window_params = [{transform_indices = @transform_0, window_bounds = array<i64: 1, 64, 256>}, {pipeline_mode = #tpu.pipeline_mode<synchronous>, transform_indices = @transform_1, window_bounds = array<i64: 64, 1>}, {pipeline_mode = #tpu.pipeline_mode<synchronous>, transform_indices = @transform_2, window_bounds = array<i64: 64, 1>}, {pipeline_mode = #tpu.pipeline_mode<synchronous>, transform_indices = @transform_3, window_bounds = array<i64: 64, 32>}, {pipeline_mode = #tpu.pipeline_mode<synchronous>, transform_indices = @transform_4, window_bounds = array<i64: 32, 64>}, {pipeline_mode = #tpu.pipeline_mode<synchronous>, transform_indices = @transform_5, window_bounds = array<i64: 72, 64>}, {pipeline_mode = #tpu.pipeline_mode<synchronous>, transform_indices = @transform_6, window_bounds = array<i64: 8, 1>}, {transform_indices = @transform_7, window_bounds = array<i64: 1, 8, 256>}]} {
    %c0 = arith.constant 0 : index
    %c0_0 = arith.constant 0 : index
    %c0_1 = arith.constant 0 : index
    %0 = vector.load %arg1[%c0, %c0_0, %c0_1] : memref<1x64x256xf32, #tpu.memory_space<vmem>>, vector<1x64x256xf32>
    %1 = vector.shape_cast %0 : vector<1x64x256xf32> to vector<64x256xf32>
    %cst = arith.constant dense<0.000000e+00> : vector<64xf32>
    %2 = vector.multi_reduction <add>, %1, %cst [1] : vector<64x256xf32> to vector<64xf32>
    %3 = vector.shape_cast %2 : vector<64xf32> to vector<64x1xf32>
    %c0_2 = arith.constant 0 : index
    %c0_3 = arith.constant 0 : index
    %4 = vector.load %arg5[%c0_2, %c0_3] : memref<32x64xf32, #tpu.memory_space<vmem>>, vector<32x64xf32>
    %cst_4 = arith.constant dense<0.000000e+00> : vector<32x1xf32>
    %5 = tpu.matmul %4, %3, %cst_4 {dimension_numbers = #tpu.dot_dimension_numbers<[1], [0], [0], [1], [0, 0, 1, 1], [], []>} : vector<32x64xf32>, vector<64x1xf32>, vector<32x1xf32> -> vector<32x1xf32>
    %cst_5 = arith.constant 0.001953125 : f32
    %6 = vector.broadcast %cst_5 : f32 to vector<32x1xf32>
    %7 = arith.mulf %5, %6 : vector<32x1xf32>
    %c0_6 = arith.constant 0 : index
    %c0_7 = arith.constant 0 : index
    %8 = vector.load %arg4[%c0_6, %c0_7] : memref<64x32xf32, #tpu.memory_space<vmem>>, vector<64x32xf32>
    %cst_8 = arith.constant dense<0.000000e+00> : vector<64x1xf32>
    %9 = tpu.matmul %8, %7, %cst_8 {dimension_numbers = #tpu.dot_dimension_numbers<[1], [0], [0], [1], [0, 0, 1, 1], [], []>} : vector<64x32xf32>, vector<32x1xf32>, vector<64x1xf32> -> vector<64x1xf32>
    %10 = vector.broadcast %9 : vector<64x1xf32> to vector<64x256xf32>
    %11 = arith.subf %1, %10 : vector<64x256xf32>
    %12 = arith.mulf %11, %11 : vector<64x256xf32>
    %cst_9 = arith.constant dense<0.000000e+00> : vector<64xf32>
    %13 = vector.multi_reduction <add>, %12, %cst_9 [1] : vector<64x256xf32> to vector<64xf32>
    %14 = vector.shape_cast %13 : vector<64xf32> to vector<64x1xf32>
    %c0_10 = arith.constant 0 : index
    %c0_11 = arith.constant 0 : index
    %15 = vector.load %arg5[%c0_10, %c0_11] : memref<32x64xf32, #tpu.memory_space<vmem>>, vector<32x64xf32>
    %cst_12 = arith.constant dense<0.000000e+00> : vector<32x1xf32>
    %16 = tpu.matmul %15, %14, %cst_12 {dimension_numbers = #tpu.dot_dimension_numbers<[1], [0], [0], [1], [0, 0, 1, 1], [], []>} : vector<32x64xf32>, vector<64x1xf32>, vector<32x1xf32> -> vector<32x1xf32>
    %cst_13 = arith.constant 0.001953125 : f32
    %17 = vector.broadcast %cst_13 : f32 to vector<32x1xf32>
    %18 = arith.mulf %16, %17 : vector<32x1xf32>
    %cst_14 = arith.constant 9.99999974E-6 : f32
    %19 = vector.broadcast %cst_14 : f32 to vector<32x1xf32>
    %20 = arith.addf %18, %19 : vector<32x1xf32>
    %21 = math.rsqrt %20 : vector<32x1xf32>
    %c0_15 = arith.constant 0 : index
    %c0_16 = arith.constant 0 : index
    %22 = vector.load %arg4[%c0_15, %c0_16] : memref<64x32xf32, #tpu.memory_space<vmem>>, vector<64x32xf32>
    %cst_17 = arith.constant dense<0.000000e+00> : vector<64x1xf32>
    %23 = tpu.matmul %22, %21, %cst_17 {dimension_numbers = #tpu.dot_dimension_numbers<[1], [0], [0], [1], [0, 0, 1, 1], [], []>} : vector<64x32xf32>, vector<32x1xf32>, vector<64x1xf32> -> vector<64x1xf32>
    %c0_18 = arith.constant 0 : index
    %c0_19 = arith.constant 0 : index
    %24 = vector.load %arg2[%c0_18, %c0_19] : memref<64x1xf32, #tpu.memory_space<vmem>>, vector<64x1xf32>
    %25 = arith.mulf %23, %24 : vector<64x1xf32>
    %26 = vector.broadcast %25 : vector<64x1xf32> to vector<64x256xf32>
    %27 = arith.mulf %11, %26 : vector<64x256xf32>
    %c0_20 = arith.constant 0 : index
    %c0_21 = arith.constant 0 : index
    %28 = vector.load %arg3[%c0_20, %c0_21] : memref<64x1xf32, #tpu.memory_space<vmem>>, vector<64x1xf32>
    %29 = vector.broadcast %28 : vector<64x1xf32> to vector<64x256xf32>
    %30 = arith.addf %27, %29 : vector<64x256xf32>
    %cst_22 = arith.constant 0.000000e+00 : f32
    %31 = vector.broadcast %cst_22 : f32 to vector<64x256xf32>
    %32 = arith.subf %31, %30 : vector<64x256xf32>
    %33 = math.exp %32 : vector<64x256xf32>
    %cst_23 = arith.constant 1.000000e+00 : f32
    %34 = vector.broadcast %cst_23 : f32 to vector<64x256xf32>
    %35 = arith.addf %34, %33 : vector<64x256xf32>
    %36 = tpu.reciprocal %35 {approx = true} : vector<64x256xf32> -> vector<64x256xf32>
    %37 = arith.mulf %30, %36 : vector<64x256xf32>
    %38 = arith.truncf %37 : vector<64x256xf32> to vector<64x256xbf16>
    %c0_24 = arith.constant 0 : index
    %c0_25 = arith.constant 0 : index
    %39 = vector.load %arg6[%c0_24, %c0_25] : memref<72x64xbf16, #tpu.memory_space<vmem>>, vector<72x64xbf16>
    %cst_26 = arith.constant dense<0.000000e+00> : vector<72x256xf32>
    %40 = tpu.matmul %39, %38, %cst_26 {dimension_numbers = #tpu.dot_dimension_numbers<[1], [0], [0], [1], [0, 0, 1, 1], [], []>} : vector<72x64xbf16>, vector<64x256xbf16>, vector<72x256xf32> -> vector<72x256xf32>
    %41 = tpu.iota {dimensions = array<i32: 1>} : vector<1x256xi32>
    %c16_i32 = arith.constant 16 : i32
    %c0_i32 = arith.constant 0 : i32
    %42 = arith.cmpi eq, %c16_i32, %c0_i32 : i32
    %c1_i32 = arith.constant 1 : i32
    %43 = arith.select %42, %c1_i32, %c16_i32 : i32
    %44 = vector.broadcast %43 : i32 to vector<1x256xi32>
    %45 = arith.remsi %41, %44 : vector<1x256xi32>
    %c0_i32_27 = arith.constant 0 : i32
    %46 = vector.broadcast %c0_i32_27 : i32 to vector<1x256xi32>
    %47 = arith.cmpi ne, %45, %46 : vector<1x256xi32>
    %c0_i32_28 = arith.constant 0 : i32
    %48 = vector.broadcast %c0_i32_28 : i32 to vector<1x256xi32>
    %49 = arith.cmpi slt, %45, %48 : vector<1x256xi32>
    %c0_i32_29 = arith.constant 0 : i32
    %50 = arith.cmpi slt, %43, %c0_i32_29 : i32
    %51 = vector.broadcast %50 : i1 to vector<1x256xi1>
    %52 = vector.broadcast %51 : vector<1x256xi1> to vector<1x256xi1>
    %53 = arith.xori %49, %52 : vector<1x256xi1>
    %54 = arith.andi %53, %47 : vector<1x256xi1>
    %55 = vector.broadcast %43 : i32 to vector<1x256xi32>
    %56 = arith.addi %45, %55 : vector<1x256xi32>
    %57 = arith.select %54, %56, %45 : vector<1x256xi1>, vector<1x256xi32>
    %c16_i32_30 = arith.constant 16 : i32
    %58 = vector.broadcast %c16_i32_30 : i32 to vector<1x256xi32>
    %59 = arith.cmpi sge, %41, %58 : vector<1x256xi32>
    %c240_i32 = arith.constant 240 : i32
    %60 = vector.broadcast %c240_i32 : i32 to vector<1x256xi32>
    %61 = arith.cmpi slt, %41, %60 : vector<1x256xi32>
    %c1_i32_31 = arith.constant 1 : i32
    %62 = vector.broadcast %c1_i32_31 : i32 to vector<1x256xi32>
    %63 = arith.cmpi sge, %57, %62 : vector<1x256xi32>
    %c14_i32 = arith.constant 14 : i32
    %64 = vector.broadcast %c14_i32 : i32 to vector<1x256xi32>
    %65 = arith.cmpi sle, %57, %64 : vector<1x256xi32>
    %66 = vector.extract_strided_slice %40 {offsets = [32, 0], sizes = [8, 256], strides = [1, 1]} : vector<72x256xf32> to vector<8x256xf32>
    %67 = vector.extract_strided_slice %40 {offsets = [0, 0], sizes = [8, 256], strides = [1, 1]} : vector<72x256xf32> to vector<8x256xf32>
    %c17_i32 = arith.constant 17 : i32
    %68 = tpu.dynamic_rotate %67 by %c17_i32 dim 1 : vector<8x256xf32>, i32 -> vector<8x256xf32>
    %69 = arith.andi %59, %63 : vector<1x256xi1>
    %cst_32 = arith.constant 0.000000e+00 : f32
    %70 = vector.shape_cast %69 : vector<1x256xi1> to vector<1x256xi1>
    %71 = vector.broadcast %70 : vector<1x256xi1> to vector<8x256xi1>
    %72 = vector.broadcast %cst_32 : f32 to vector<8x256xf32>
    %73 = arith.select %71, %68, %72 : vector<8x256xi1>, vector<8x256xf32>
    %74 = arith.addf %66, %73 : vector<8x256xf32>
    %75 = vector.extract_strided_slice %40 {offsets = [8, 0], sizes = [8, 256], strides = [1, 1]} : vector<72x256xf32> to vector<8x256xf32>
    %c16_i32_33 = arith.constant 16 : i32
    %76 = tpu.dynamic_rotate %75 by %c16_i32_33 dim 1 : vector<8x256xf32>, i32 -> vector<8x256xf32>
    %cst_34 = arith.constant 0.000000e+00 : f32
    %77 = vector.shape_cast %59 : vector<1x256xi1> to vector<1x256xi1>
    %78 = vector.broadcast %77 : vector<1x256xi1> to vector<8x256xi1>
    %79 = vector.broadcast %cst_34 : f32 to vector<8x256xf32>
    %80 = arith.select %78, %76, %79 : vector<8x256xi1>, vector<8x256xf32>
    %81 = arith.addf %74, %80 : vector<8x256xf32>
    %82 = vector.extract_strided_slice %40 {offsets = [16, 0], sizes = [8, 256], strides = [1, 1]} : vector<72x256xf32> to vector<8x256xf32>
    %c15_i32 = arith.constant 15 : i32
    %83 = tpu.dynamic_rotate %82 by %c15_i32 dim 1 : vector<8x256xf32>, i32 -> vector<8x256xf32>
    %84 = arith.andi %59, %65 : vector<1x256xi1>
    %cst_35 = arith.constant 0.000000e+00 : f32
    %85 = vector.shape_cast %84 : vector<1x256xi1> to vector<1x256xi1>
    %86 = vector.broadcast %85 : vector<1x256xi1> to vector<8x256xi1>
    %87 = vector.broadcast %cst_35 : f32 to vector<8x256xf32>
    %88 = arith.select %86, %83, %87 : vector<8x256xi1>, vector<8x256xf32>
    %89 = arith.addf %81, %88 : vector<8x256xf32>
    %90 = vector.extract_strided_slice %40 {offsets = [24, 0], sizes = [8, 256], strides = [1, 1]} : vector<72x256xf32> to vector<8x256xf32>
    %c1_i32_36 = arith.constant 1 : i32
    %91 = tpu.dynamic_rotate %90 by %c1_i32_36 dim 1 : vector<8x256xf32>, i32 -> vector<8x256xf32>
    %cst_37 = arith.constant 0.000000e+00 : f32
    %92 = vector.shape_cast %63 : vector<1x256xi1> to vector<1x256xi1>
    %93 = vector.broadcast %92 : vector<1x256xi1> to vector<8x256xi1>
    %94 = vector.broadcast %cst_37 : f32 to vector<8x256xf32>
    %95 = arith.select %93, %91, %94 : vector<8x256xi1>, vector<8x256xf32>
    %96 = arith.addf %89, %95 : vector<8x256xf32>
    %97 = vector.extract_strided_slice %40 {offsets = [40, 0], sizes = [8, 256], strides = [1, 1]} : vector<72x256xf32> to vector<8x256xf32>
    %c255_i32 = arith.constant 255 : i32
    %98 = tpu.dynamic_rotate %97 by %c255_i32 dim 1 : vector<8x256xf32>, i32 -> vector<8x256xf32>
    %cst_38 = arith.constant 0.000000e+00 : f32
    %99 = vector.shape_cast %65 : vector<1x256xi1> to vector<1x256xi1>
    %100 = vector.broadcast %99 : vector<1x256xi1> to vector<8x256xi1>
    %101 = vector.broadcast %cst_38 : f32 to vector<8x256xf32>
    %102 = arith.select %100, %98, %101 : vector<8x256xi1>, vector<8x256xf32>
    %103 = arith.addf %96, %102 : vector<8x256xf32>
    %104 = vector.extract_strided_slice %40 {offsets = [48, 0], sizes = [8, 256], strides = [1, 1]} : vector<72x256xf32> to vector<8x256xf32>
    %c241_i32 = arith.constant 241 : i32
    %105 = tpu.dynamic_rotate %104 by %c241_i32 dim 1 : vector<8x256xf32>, i32 -> vector<8x256xf32>
    %106 = arith.andi %61, %63 : vector<1x256xi1>
    %cst_39 = arith.constant 0.000000e+00 : f32
    %107 = vector.shape_cast %106 : vector<1x256xi1> to vector<1x256xi1>
    %108 = vector.broadcast %107 : vector<1x256xi1> to vector<8x256xi1>
    %109 = vector.broadcast %cst_39 : f32 to vector<8x256xf32>
    %110 = arith.select %108, %105, %109 : vector<8x256xi1>, vector<8x256xf32>
    %111 = arith.addf %103, %110 : vector<8x256xf32>
    %112 = vector.extract_strided_slice %40 {offsets = [56, 0], sizes = [8, 256], strides = [1, 1]} : vector<72x256xf32> to vector<8x256xf32>
    %c240_i32_40 = arith.constant 240 : i32
    %113 = tpu.dynamic_rotate %112 by %c240_i32_40 dim 1 : vector<8x256xf32>, i32 -> vector<8x256xf32>
    %cst_41 = arith.constant 0.000000e+00 : f32
    %114 = vector.shape_cast %61 : vector<1x256xi1> to vector<1x256xi1>
    %115 = vector.broadcast %114 : vector<1x256xi1> to vector<8x256xi1>
    %116 = vector.broadcast %cst_41 : f32 to vector<8x256xf32>
    %117 = arith.select %115, %113, %116 : vector<8x256xi1>, vector<8x256xf32>
    %118 = arith.addf %111, %117 : vector<8x256xf32>
    %119 = vector.extract_strided_slice %40 {offsets = [64, 0], sizes = [8, 256], strides = [1, 1]} : vector<72x256xf32> to vector<8x256xf32>
    %c239_i32 = arith.constant 239 : i32
    %120 = tpu.dynamic_rotate %119 by %c239_i32 dim 1 : vector<8x256xf32>, i32 -> vector<8x256xf32>
    %121 = arith.andi %61, %65 : vector<1x256xi1>
    %cst_42 = arith.constant 0.000000e+00 : f32
    %122 = vector.shape_cast %121 : vector<1x256xi1> to vector<1x256xi1>
    %123 = vector.broadcast %122 : vector<1x256xi1> to vector<8x256xi1>
    %124 = vector.broadcast %cst_42 : f32 to vector<8x256xf32>
    %125 = arith.select %123, %120, %124 : vector<8x256xi1>, vector<8x256xf32>
    %126 = arith.addf %118, %125 : vector<8x256xf32>
    %c0_43 = arith.constant 0 : index
    %c0_44 = arith.constant 0 : index
    %127 = vector.load %arg7[%c0_43, %c0_44] : memref<8x1xf32, #tpu.memory_space<vmem>>, vector<8x1xf32>
    %128 = vector.broadcast %127 : vector<8x1xf32> to vector<8x256xf32>
    %129 = arith.addf %126, %128 : vector<8x256xf32>
    %c0_45 = arith.constant 0 : index
    %c0_46 = arith.constant 0 : index
    %c0_47 = arith.constant 0 : index
    %130 = vector.load %arg8[%c0_45, %c0_46, %c0_47] : memref<1x8x256xf32, #tpu.memory_space<vmem>>, vector<1x8x256xf32>
    %131 = vector.shape_cast %130 : vector<1x8x256xf32> to vector<8x256xf32>
    %132 = vector.shape_cast %129 : vector<8x256xf32> to vector<1x8x256xf32>
    tpu.vector_store %arg8[%c0_45, %c0_46, %c0_47], %132 {strides = array<i32>} : memref<1x8x256xf32, #tpu.memory_space<vmem>>, vector<1x8x256xf32>,
    return
  }
  func.func @transform_0(%arg0: i32) -> (i32, i32, i32) {
    %c0_i32 = arith.constant 0 : i32
    %c0_i32_0 = arith.constant 0 : i32
    %c0_i32_1 = arith.constant 0 : i32
    return %arg0, %c0_i32, %c0_i32_0 : i32, i32, i32
  }
  func.func @transform_1(%arg0: i32) -> (i32, i32) {
    %c0_i32 = arith.constant 0 : i32
    %c0_i32_0 = arith.constant 0 : i32
    %c0_i32_1 = arith.constant 0 : i32
    return %c0_i32, %c0_i32_0 : i32, i32
  }
  func.func @transform_2(%arg0: i32) -> (i32, i32) {
    %c0_i32 = arith.constant 0 : i32
    %c0_i32_0 = arith.constant 0 : i32
    %c0_i32_1 = arith.constant 0 : i32
    return %c0_i32, %c0_i32_0 : i32, i32
  }
  func.func @transform_3(%arg0: i32) -> (i32, i32) {
    %c0_i32 = arith.constant 0 : i32
    %c0_i32_0 = arith.constant 0 : i32
    %c0_i32_1 = arith.constant 0 : i32
    return %c0_i32, %c0_i32_0 : i32, i32
  }
  func.func @transform_4(%arg0: i32) -> (i32, i32) {
    %c0_i32 = arith.constant 0 : i32
    %c0_i32_0 = arith.constant 0 : i32
    %c0_i32_1 = arith.constant 0 : i32
    return %c0_i32, %c0_i32_0 : i32, i32
  }
  func.func @transform_5(%arg0: i32) -> (i32, i32) {
    %c0_i32 = arith.constant 0 : i32
    %c0_i32_0 = arith.constant 0 : i32
    %c0_i32_1 = arith.constant 0 : i32
    return %c0_i32, %c0_i32_0 : i32, i32
  }
  func.func @transform_6(%arg0: i32) -> (i32, i32) {
    %c0_i32 = arith.constant 0 : i32
    %c0_i32_0 = arith.constant 0 : i32
    %c0_i32_1 = arith.constant 0 : i32
    return %c0_i32, %c0_i32_0 : i32, i32
  }
  func.func @transform_7(%arg0: i32) -> (i32, i32, i32) {
    %c0_i32 = arith.constant 0 : i32
    %c0_i32_0 = arith.constant 0 : i32
    %c0_i32_1 = arith.constant 0 : i32
    return %arg0, %c0_i32, %c0_i32_0 : i32, i32, i32
  }
}

</mosaic_0001>

<llo_original>
// kernel: tpu_custom_call.1
$region0: #{tpu_custom_call.1}
  #allocation0 [shape = 'u32[]', space=smem, size = 0x4, offset = 0x4, fixed_abs, tag = 'smem constant byte address 0x4 - core index']
  #allocation1 [shape = 'u32[144,128]{1,0:T(1,128)}', space=vmem, size = 0x12000, scoped, tag = 'internal scratch']
  %s0 = inlined_call_operand.vmem [shape: f32[2,64,256], index: 0, kind: input, shape index: {}]
  %s1 = inlined_call_operand.vmem [shape: f32[64,1], index: 1, kind: input, shape index: {}]
  %s2 = inlined_call_operand.vmem [shape: f32[64,1], index: 2, kind: input, shape index: {}]
  %s3 = inlined_call_operand.vmem [shape: f32[64,32], index: 3, kind: input, shape index: {}]
  %s4 = inlined_call_operand.hbm [shape: f32[32,64], index: 4, kind: input, shape index: {}]
  %s5 = inlined_call_operand.vmem [shape: bf16[72,64], index: 5, kind: input, shape index: {}]
  %s6 = inlined_call_operand.vmem [shape: f32[8,1], index: 6, kind: input, shape index: {}]
  %s7 = inlined_call_operand.hbm [shape: f32[2,8,256], index: 7, kind: output, shape index: {}]
  %s8 = sld [smem:[#allocation0]]
  $region65: #{tpu_custom_call.1} parent=0
    _
  %s10 = ssub.s32 1, %s8
  %s11 = scalar_select 0, %s10, %s8
  $region1: #{tpu_custom_call.1} parent=0
    #allocation2 [shape = 'u8[16384]{0}', space=vmem, size = 0x4000, scoped, tag = 'input window, operand 4, single buffered']
    #allocation3 [shape = 's32[2]{0}', space=sflag, size = 0x8, scoped, tag = 'scoped memory for tpu_custom_call.1']
    #allocation4 [shape = 's32[2]{0}', space=sflag, size = 0x8, scoped, tag = 'scoped memory for tpu_custom_call.1']
    #allocation5 [shape = 'u8[16384]{0}', space=vmem, size = 0x4000, scoped, tag = 'output window, operand 0']
    %12 = vsyncpa [#allocation3], 0
    %13 = vsyncpa [#allocation4], 0
    %s14 = scalar_lea.sflag [#allocation4], 1
    %15 = vsyncpa %s14, 0
    loop: start=0, step=1, limit=4
    $region2: #{tpu_custom_call.1} parent=1 // loop_pre_header
      _
    $region3: #{tpu_custom_call.1} parent=1 // loop_header
      %s17 = sphi 0, %s21
      %p18 = scmp.ge.s32.totalorder %s17, 4
      %s27 = sphi 0, %s29
      %s30 = sphi 0, %s27
      %s31 = sphi 0, %s30
      %s47 = sphi 0, %s31
      %s51 = sphi 0, %s51
      %s53 = sphi 0, %s51
      %s54 = sphi 0, %s53
      %s68 = sphi 0, %s54
      %s72 = sphi 0, %s72
      %s74 = sphi 0, %s72
      %s75 = sphi 0, %s74
      %s89 = sphi 0, %s75
      %s93 = sphi 0, %s93
      %s95 = sphi 0, %s93
      %s96 = sphi 0, %s95
      %s110 = sphi 0, %s96
      %s114 = sphi 0, %s114
      %s116 = sphi 0, %s114
      %s117 = sphi 0, %s116
      %s131 = sphi 0, %s117
      %s135 = sphi 0, %s135
      %s137 = sphi 0, %s135
      %s138 = sphi 0, %s137
      %s152 = sphi 0, %s138
      %s156 = sphi 0, %s156
      %s158 = sphi 0, %s156
      %s159 = sphi 0, %s158
      %s173 = sphi 0, %s159
      %s179 = sphi 0, %s181
      %s182 = sphi 0, %s179
      %s183 = sphi 0, %s182
      %s199 = sphi 0, %s183
    $region4: #{tpu_custom_call.1} parent=1 // loop_header_branch
      %20 = sbr.rel (%p18) target = $region8
    $region5: #{tpu_custom_call.1} parent=1 // loop_body
      %s22 = ssub.s32 %s17, 1
      %s23 = ssub.s32 %s17, 2
      %s24 = sadd.s32 %s17, 1
      %s25 = ssub.s32 %s17, %s24
      %p26 = scmp.eq.s32.totalorder %s25, 0
      %s28 = sadd.s32 %s27, 1
      %s29 = scalar_select %p26, %s27, %s28
      %p32 = pneg %p26
      %p33 = scmp.eq.s32.totalorder %s17, 1
      %p34 = por %p32, %p33
      %p35 = scmp.ne.s32.totalorder %s27, %s30
      %p36 = scmp.eq.s32.totalorder %s17, 0
      %p37 = por %p35, %p36
      %p38 = scmp.ne.s32.totalorder %s27, %s30
      %p39 = scmp.eq.s32.totalorder %s22, 1
      %p40 = por %p38, %p39
      %p41 = scmp.ne.s32.totalorder %s30, %s31
      %p42 = scmp.eq.s32.totalorder %s22, 0
      %p43 = por %p41, %p42
      %p44 = scmp.ne.s32.totalorder %s30, %s31
      %p45 = scmp.eq.s32.totalorder %s23, 1
      %p46 = por %p44, %p45
      %p48 = scmp.ne.s32.totalorder %s31, %s47
      %p49 = scmp.eq.s32.totalorder %s23, 0
      %p50 = por %p48, %p49
      %s52 = sadd.s32 %s51, 1
      %p55 = scmp.eq.s32.totalorder %s17, 1
      %p56 = scmp.ne.s32.totalorder %s51, %s53
      %p57 = scmp.eq.s32.totalorder %s17, 0
      %p58 = por %p56, %p57
      %p59 = scmp.ne.s32.totalorder %s51, %s53
      %p60 = scmp.eq.s32.totalorder %s22, 1
      %p61 = por %p59, %p60
      %p62 = scmp.ne.s32.totalorder %s53, %s54
      %p63 = scmp.eq.s32.totalorder %s22, 0
      %p64 = por %p62, %p63
      %p65 = scmp.ne.s32.totalorder %s53, %s54
      %p66 = scmp.eq.s32.totalorder %s23, 1
      %p67 = por %p65, %p66
      %p69 = scmp.ne.s32.totalorder %s54, %s68
      %p70 = scmp.eq.s32.totalorder %s23, 0
      %p71 = por %p69, %p70
      %s73 = sadd.s32 %s72, 1
      %p76 = scmp.eq.s32.totalorder %s17, 1
      %p77 = scmp.ne.s32.totalorder %s72, %s74
      %p78 = scmp.eq.s32.totalorder %s17, 0
      %p79 = por %p77, %p78
      %p80 = scmp.ne.s32.totalorder %s72, %s74
      %p81 = scmp.eq.s32.totalorder %s22, 1
      %p82 = por %p80, %p81
      %p83 = scmp.ne.s32.totalorder %s74, %s75
      %p84 = scmp.eq.s32.totalorder %s22, 0
      %p85 = por %p83, %p84
      %p86 = scmp.ne.s32.totalorder %s74, %s75
      %p87 = scmp.eq.s32.totalorder %s23, 1
      %p88 = por %p86, %p87
      %p90 = scmp.ne.s32.totalorder %s75, %s89
      %p91 = scmp.eq.s32.totalorder %s23, 0
      %p92 = por %p90, %p91
      %s94 = sadd.s32 %s93, 1
      %p97 = scmp.eq.s32.totalorder %s17, 1
      %p98 = scmp.ne.s32.totalorder %s93, %s95
      %p99 = scmp.eq.s32.totalorder %s17, 0
      %p100 = por %p98, %p99
      %p101 = scmp.ne.s32.totalorder %s93, %s95
      %p102 = scmp.eq.s32.totalorder %s22, 1
      %p103 = por %p101, %p102
      %p104 = scmp.ne.s32.totalorder %s95, %s96
      %p105 = scmp.eq.s32.totalorder %s22, 0
      %p106 = por %p104, %p105
      %p107 = scmp.ne.s32.totalorder %s95, %s96
      %p108 = scmp.eq.s32.totalorder %s23, 1
      %p109 = por %p107, %p108
      %p111 = scmp.ne.s32.totalorder %s96, %s110
      %p112 = scmp.eq.s32.totalorder %s23, 0
      %p113 = por %p111, %p112
      %s115 = sadd.s32 %s114, 1
      %p118 = scmp.eq.s32.totalorder %s17, 1
      %p119 = scmp.ne.s32.totalorder %s114, %s116
      %p120 = scmp.eq.s32.totalorder %s17, 0
      %p121 = por %p119, %p120
      %p122 = scmp.ne.s32.totalorder %s114, %s116
      %p123 = scmp.eq.s32.totalorder %s22, 1
      %p124 = por %p122, %p123
      %p125 = scmp.ne.s32.totalorder %s116, %s117
      %p126 = scmp.eq.s32.totalorder %s22, 0
      %p127 = por %p125, %p126
      %p128 = scmp.ne.s32.totalorder %s116, %s117
      %p129 = scmp.eq.s32.totalorder %s23, 1
      %p130 = por %p128, %p129
      %p132 = scmp.ne.s32.totalorder %s117, %s131
      %p133 = scmp.eq.s32.totalorder %s23, 0
      %p134 = por %p132, %p133
      %s136 = sadd.s32 %s135, 1
      %p139 = scmp.eq.s32.totalorder %s17, 1
      %p140 = scmp.ne.s32.totalorder %s135, %s137
      %p141 = scmp.eq.s32.totalorder %s17, 0
      %p142 = por %p140, %p141
      %p143 = scmp.ne.s32.totalorder %s135, %s137
      %p144 = scmp.eq.s32.totalorder %s22, 1
      %p145 = por %p143, %p144
      %p146 = scmp.ne.s32.totalorder %s137, %s138
      %p147 = scmp.eq.s32.totalorder %s22, 0
      %p148 = por %p146, %p147
      %p149 = scmp.ne.s32.totalorder %s137, %s138
      %p150 = scmp.eq.s32.totalorder %s23, 1
      %p151 = por %p149, %p150
      %p153 = scmp.ne.s32.totalorder %s138, %s152
      %p154 = scmp.eq.s32.totalorder %s23, 0
      %p155 = por %p153, %p154
      %s157 = sadd.s32 %s156, 1
      %p160 = scmp.eq.s32.totalorder %s17, 1
      %p161 = scmp.ne.s32.totalorder %s156, %s158
      %p162 = scmp.eq.s32.totalorder %s17, 0
      %p163 = por %p161, %p162
      %p164 = scmp.ne.s32.totalorder %s156, %s158
      %p165 = scmp.eq.s32.totalorder %s22, 1
      %p166 = por %p164, %p165
      %p167 = scmp.ne.s32.totalorder %s158, %s159
      %p168 = scmp.eq.s32.totalorder %s22, 0
      %p169 = por %p167, %p168
      %p170 = scmp.ne.s32.totalorder %s158, %s159
      %p171 = scmp.eq.s32.totalorder %s23, 1
      %p172 = por %p170, %p171
      %p174 = scmp.ne.s32.totalorder %s159, %s173
      %p175 = scmp.eq.s32.totalorder %s23, 0
      %p176 = por %p174, %p175
      %s177 = ssub.s32 %s17, %s24
      %p178 = scmp.eq.s32.totalorder %s177, 0
      %s180 = sadd.s32 %s179, 1
      %s181 = scalar_select %p178, %s179, %s180
      %p184 = pneg %p178
      %p185 = scmp.eq.s32.totalorder %s17, 1
      %p186 = por %p184, %p185
      %p187 = scmp.ne.s32.totalorder %s179, %s182
      %p188 = scmp.eq.s32.totalorder %s17, 0
      %p189 = por %p187, %p188
      %p190 = scmp.ne.s32.totalorder %s179, %s182
      %p191 = scmp.eq.s32.totalorder %s22, 1
      %p192 = por %p190, %p191
      %p193 = scmp.ne.s32.totalorder %s182, %s183
      %p194 = scmp.eq.s32.totalorder %s22, 0
      %p195 = por %p193, %p194
      %p196 = scmp.ne.s32.totalorder %s182, %s183
      %p197 = scmp.eq.s32.totalorder %s23, 1
      %p198 = por %p196, %p197
      %p200 = scmp.ne.s32.totalorder %s183, %s199
      %p201 = scmp.eq.s32.totalorder %s23, 0
      %p202 = por %p200, %p201
      %p203 = scmp.le.s32.totalorder 1, %s17
      %p204 = scmp.lt.s32.totalorder %s17, 3
      %p205 = pnand %p203, %p204
      %p206 = pneg %p205
      // Predicated region
      $region9: #{tpu_custom_call.1} parent=5 // pred_check
        _
      $region10: #{tpu_custom_call.1} parent=5 // pred_check_branch
        %208 = sbr.rel (%p205) target = $region12
      $region11: #{tpu_custom_call.1} parent=5 // pred_region
        %s209 = ssub.s32 %s17, 1
        // Predicated region
        $region13: #{tpu_custom_call.1} parent=11 // pred_check
          %p210 = pneg %p64
        $region14: #{tpu_custom_call.1} parent=11 // pred_check_branch
          %212 = sbr.rel (%p210) target = $region16
        $region15: #{tpu_custom_call.1} parent=11 // pred_region
          _
        $region16: #{tpu_custom_call.1} parent=11 // pred_fallthru
          _
        // Predicated region
        $region17: #{tpu_custom_call.1} parent=11 // pred_check
          %p213 = pneg %p85
        $region18: #{tpu_custom_call.1} parent=11 // pred_check_branch
          %215 = sbr.rel (%p213) target = $region20
        $region19: #{tpu_custom_call.1} parent=11 // pred_region
          _
        $region20: #{tpu_custom_call.1} parent=11 // pred_fallthru
          _
        // Predicated region
        $region21: #{tpu_custom_call.1} parent=11 // pred_check
          %p216 = pneg %p106
        $region22: #{tpu_custom_call.1} parent=11 // pred_check_branch
          %218 = sbr.rel (%p216) target = $region24
        $region23: #{tpu_custom_call.1} parent=11 // pred_region
          _
        $region24: #{tpu_custom_call.1} parent=11 // pred_fallthru
          _
        // Predicated region
        $region25: #{tpu_custom_call.1} parent=11 // pred_check
          %p219 = pneg %p127
        $region26: #{tpu_custom_call.1} parent=11 // pred_check_branch
          %221 = sbr.rel (%p219) target = $region28
        $region27: #{tpu_custom_call.1} parent=11 // pred_region
          %s223 = ssub.s32 512, 512
          %224 = vsyncadd [#allocation3], %s223
          %s225 = sshll.u32 [#allocation2], 4
          %s226 = int_to_ptr.vmem [resolvable:$true] %s225
          %231 = dma.hbm_to_vmem [thread:$0]  %s4, 512, %s226, [#allocation3], 128, 128, 8
        $region28: #{tpu_custom_call.1} parent=11 // pred_fallthru
          _
        // Predicated region
        $region29: #{tpu_custom_call.1} parent=11 // pred_check
          %p232 = pneg %p148
        $region30: #{tpu_custom_call.1} parent=11 // pred_check_branch
          %234 = sbr.rel (%p232) target = $region32
        $region31: #{tpu_custom_call.1} parent=11 // pred_region
          _
        $region32: #{tpu_custom_call.1} parent=11 // pred_fallthru
          _
        // Predicated region
        $region33: #{tpu_custom_call.1} parent=11 // pred_check
          %p235 = pneg %p169
        $region34: #{tpu_custom_call.1} parent=11 // pred_check_branch
          %237 = sbr.rel (%p235) target = $region36
        $region35: #{tpu_custom_call.1} parent=11 // pred_region
          _
        $region36: #{tpu_custom_call.1} parent=11 // pred_fallthru
          _
      $region12: #{tpu_custom_call.1} parent=5 // pred_fallthru
        _
      %p238 = scmp.lt.s32.totalorder %s17, 2
      // Predicated region
      $region37: #{tpu_custom_call.1} parent=5 // pred_check
        %p239 = pneg %p238
      $region38: #{tpu_custom_call.1} parent=5 // pred_check_branch
        %241 = sbr.rel (%p239) target = $region40
      $region39: #{tpu_custom_call.1} parent=5 // pred_region
        // Predicated region
        $region41: #{tpu_custom_call.1} parent=39 // pred_check
          %p242 = pneg %p37
        $region42: #{tpu_custom_call.1} parent=39 // pred_check_branch
          %244 = sbr.rel (%p242) target = $region44
        $region43: #{tpu_custom_call.1} parent=39 // pred_region
          %p245 = scmp.lt.s32.totalorder %s17, 1
          %s246 = scalar_select %p245, %s17, 1
          %s247 = smul.addr %s246, 16
          %s248 = smul.addr %s247, 8
          %s249 = scalar_lea.vmem %s0, %s248
        $region44: #{tpu_custom_call.1} parent=39 // pred_fallthru
          _
      $region40: #{tpu_custom_call.1} parent=5 // pred_fallthru
        _
      %p250 = scmp.le.s32.totalorder 1, %s17
      %p251 = scmp.lt.s32.totalorder %s17, 3
      %p252 = pnand %p250, %p251
      %p253 = pneg %p252
      // Predicated region
      $region45: #{tpu_custom_call.1} parent=5 // pred_check
        _
      $region46: #{tpu_custom_call.1} parent=5 // pred_check_branch
        %255 = sbr.rel (%p252) target = $region48
      $region47: #{tpu_custom_call.1} parent=5 // pred_region
        %s256 = ssub.s32 %s17, 1
        // Predicated region
        $region49: #{tpu_custom_call.1} parent=47 // pred_check
          %p257 = pneg %p127
        $region50: #{tpu_custom_call.1} parent=47 // pred_check_branch
          %259 = sbr.rel (%p257) target = $region52
        $region51: #{tpu_custom_call.1} parent=47 // pred_region
          %260 = dma.done [#allocation3], 512
        $region52: #{tpu_custom_call.1} parent=47 // pred_fallthru
          _
        %p261 = scmp.lt.s32.totalorder %s22, 1
        %s262 = scalar_select %p261, %s22, 1
        %s263 = smul.addr %s262, 16
        %s264 = smul.addr %s263, 8
        %s265 = scalar_lea.vmem %s0, %s264
        %p266 = pneg %p43
        %p267 = pneg %p40
        %p268 = pneg %p64
        %p269 = pneg %p61
        %p270 = pneg %p85
        %p271 = pneg %p82
        %p272 = pneg %p106
        %p273 = pneg %p103
        %p274 = pneg %p127
        %p275 = pneg %p124
        %p276 = pneg %p148
        %p277 = pneg %p145
        %p278 = pneg %p169
        %p279 = pneg %p166
        %p280 = pneg %p195
        %p281 = pneg %p192
        %s282 = sand.u32 %s182, 1
        %s283 = scalar_lea.sflag [#allocation4], %s282
        %s284 = sand.u32 %s182, 1
        %s285 = smul.addr %s284, 16
        %s286 = scalar_lea.vmem [#allocation5], %s285
        %p287 = scmp.lt.s32.totalorder %s22, 1
        %s288 = scalar_select %p287, %s22, 1
        %s289 = smul.addr %s288, 16
        %s290 = smul.addr %s289, 8
        %s291 = scalar_lea.vmem %s0, %s290
        %v293 = vld [vmem:[%s291] sm:$0xff]
        %v294 = vld [vmem:[%s291 + $0x8] sm:$0xff]
        %v295 = vld [vmem:[%s291 + $0x10] sm:$0xff]
        %v296 = vld [vmem:[%s291 + $0x18] sm:$0xff]
        %v297 = vld [vmem:[%s291 + $0x20] sm:$0xff]
        %v298 = vld [vmem:[%s291 + $0x28] sm:$0xff]
        %v299 = vld [vmem:[%s291 + $0x30] sm:$0xff]
        %v300 = vld [vmem:[%s291 + $0x38] sm:$0xff]
        %v301 = vld [vmem:[%s291 + $0x40] sm:$0xff]
        %v302 = vld [vmem:[%s291 + $0x48] sm:$0xff]
        %v303 = vld [vmem:[%s291 + $0x50] sm:$0xff]
        %v304 = vld [vmem:[%s291 + $0x58] sm:$0xff]
        %v305 = vld [vmem:[%s291 + $0x60] sm:$0xff]
        %v306 = vld [vmem:[%s291 + $0x68] sm:$0xff]
        %v307 = vld [vmem:[%s291 + $0x70] sm:$0xff]
        %v308 = vld [vmem:[%s291 + $0x78] sm:$0xff]
        %v309 = vadd.f32 %v293, %v294
        %310 = vadd.xlane.f32.xlu0 %v309
        %v311 = vpop.xlane.xlu0 %310
        %v312 = vadd.f32 %v295, %v296
        %313 = vadd.xlane.f32.xlu0 %v312
        %v314 = vpop.xlane.xlu0 %313
        %v315 = vadd.f32 %v297, %v298
        %316 = vadd.xlane.f32.xlu0 %v315
        %v317 = vpop.xlane.xlu0 %316
        %v318 = vadd.f32 %v299, %v300
        %319 = vadd.xlane.f32.xlu0 %v318
        %v320 = vpop.xlane.xlu0 %319
        %v321 = vadd.f32 %v301, %v302
        %322 = vadd.xlane.f32.xlu0 %v321
        %v323 = vpop.xlane.xlu0 %322
        %v324 = vadd.f32 %v303, %v304
        %325 = vadd.xlane.f32.xlu0 %v324
        %v326 = vpop.xlane.xlu0 %325
        %v327 = vadd.f32 %v305, %v306
        %328 = vadd.xlane.f32.xlu0 %v327
        %v329 = vpop.xlane.xlu0 %328
        %v330 = vadd.f32 %v307, %v308
        %331 = vadd.xlane.f32.xlu0 %v330
        %v332 = vpop.xlane.xlu0 %331
        %v333 = vld [vmem:[#allocation2] sm:$0xff]
        %v334 = vld [vmem:[#allocation2 + $0x8] sm:$0xff]
        %v335 = vld [vmem:[#allocation2 + $0x10] sm:$0xff]
        %v336 = vld [vmem:[#allocation2 + $0x18] sm:$0xff]
        %vm337 = vcmask 523264
        %v339 = vsel %vm337, %v333, 0
        %v342 = vsel %vm337, %v334, 0
        %v345 = vsel %vm337, %v335, 0
        %v348 = vsel %vm337, %v336, 0
        %350 = vmatprep.subr.mxu0 0.0
        %351 = vmatpush1.msra.mxu0 0.0
        %352 = vmatprep.subr.mxu0 0.0
        %353 = vmatpush1.msra.mxu0 0.0
        %354 = vmatprep.subr.mxu0 0.0
        %355 = vmatpush1.msra.mxu0 0.0
        %356 = vmatprep.subr.mxu0 0.0
        %357 = vmatpush1.msra.mxu0 0.0
        %358 = vmatprep.subr.mxu0 0.0
        %359 = vmatpush1.msra.mxu0 0.0
        %360 = vmatprep.subr.mxu0 0.0
        %361 = vmatpush1.msra.mxu0 0.0
        %362 = vmatprep.subr.mxu0 0.0
        %363 = vmatpush1.msra.mxu0 0.0
        %364 = vmatprep.subr.mxu0 0.0
        %365 = vmatpush1.msra.mxu0 0.0
        %366 = vmatprep.subr.mxu0 0.0
        %367 = vmatpush1.msra.mxu0 %v332
        %368 = vmatprep.subr.mxu0 0.0
        %369 = vmatpush1.msra.mxu0 %v329
        %370 = vmatprep.subr.mxu0 0.0
        %371 = vmatpush1.msra.mxu0 %v326
        %372 = vmatprep.subr.mxu0 0.0
        %373 = vmatpush1.msra.mxu0 %v323
        %374 = vmatprep.subr.mxu0 0.0
        %375 = vmatpush1.msra.mxu0 %v320
        %376 = vmatprep.subr.mxu0 0.0
        %377 = vmatpush1.msra.mxu0 %v317
        %378 = vmatprep.subr.mxu0 0.0
        %379 = vmatpush1.msra.mxu0 %v314
        %380 = vmatprep.subr.mxu0 0.0
        %381 = vmatpush1.msra.mxu0 %v311
        %382 = vmatprep.subr.mxu0 0.0
        %383 = vmatpush2.msra.mxu0 0.0
        %384 = vmatprep.subr.mxu0 0.0
        %385 = vmatpush2.msra.mxu0 0.0
        %386 = vmatprep.subr.mxu0 0.0
        %387 = vmatpush2.msra.mxu0 0.0
        %388 = vmatprep.subr.mxu0 0.0
        %389 = vmatpush2.msra.mxu0 0.0
        %390 = vmatprep.subr.mxu0 0.0
        %391 = vmatpush2.msra.mxu0 0.0
        %392 = vmatprep.subr.mxu0 0.0
        %393 = vmatpush2.msra.mxu0 0.0
        %394 = vmatprep.subr.mxu0 0.0
        %395 = vmatpush2.msra.mxu0 0.0
        %396 = vmatprep.subr.mxu0 0.0
        %397 = vmatpush2.msra.mxu0 0.0
        %398 = vmatprep.subr.mxu0 0.0
        %399 = vmatpush2.msra.mxu0 0.0
        %400 = vmatprep.subr.mxu0 0.0
        %401 = vmatpush2.msra.mxu0 0.0
        %402 = vmatprep.subr.mxu0 0.0
        %403 = vmatpush2.msra.mxu0 0.0
        %404 = vmatprep.subr.mxu0 0.0
        %405 = vmatpush2.msra.mxu0 0.0
        %406 = vmatprep.subr.mxu0 0.0
        %407 = vmatpush2.msra.mxu0 0.0
        %408 = vmatprep.subr.mxu0 0.0
        %409 = vmatpush2.msra.mxu0 0.0
        %410 = vmatprep.subr.mxu0 0.0
        %411 = vmatpush2.msra.mxu0 0.0
        %412 = vmatprep.subr.mxu0 0.0
        %413 = vmatpush2.msra.mxu0 0.0
        %414 = vmatprep.mubr.f32.mxu0 0.0
        %415 = vmatmul.mubr.f32.gmra.mxu0 %v339
        %v416 = vpop.f32.mrf.mxu0
        %v417 = vadd.f32 0.0, %v416
        %v418 = vpop.f32.mrf.mxu0
        %419 = vmatprep.mubr.f32.mxu0 0.0
        %420 = vmatmul.mubr.f32.gmra.mxu0 %v342
        %v421 = vpop.f32.mrf.mxu0
        %v422 = vadd.f32 0.0, %v421
        %v423 = vpop.f32.mrf.mxu0
        %424 = vmatprep.mubr.f32.mxu0 0.0
        %425 = vmatmul.mubr.f32.gmra.mxu0 %v345
        %v426 = vpop.f32.mrf.mxu0
        %v427 = vadd.f32 0.0, %v426
        %v428 = vpop.f32.mrf.mxu0
        %429 = vmatprep.mubr.f32.mxu0 0.0
        %430 = vmatmul.mubr.f32.gmra.mxu0 %v348
        %v431 = vpop.f32.mrf.mxu0
        %v432 = vadd.f32 0.0, %v431
        %v433 = vpop.f32.mrf.mxu0
        %434 = vdwg.mxu0
        %v435 = vmul.f32 %v417, 0.001953125
        %v436 = vmul.f32 %v422, 0.001953125
        %v437 = vmul.f32 %v427, 0.001953125
        %v438 = vmul.f32 %v432, 0.001953125
        %v439 = vld [vmem:[%s3] sm:$0xff]
        %v440 = vld [vmem:[%s3 + $0x8] sm:$0xff]
        %v441 = vld [vmem:[%s3 + $0x10] sm:$0xff]
        %v442 = vld [vmem:[%s3 + $0x18] sm:$0xff]
        %v443 = vld [vmem:[%s3 + $0x20] sm:$0xff]
        %v444 = vld [vmem:[%s3 + $0x28] sm:$0xff]
        %v445 = vld [vmem:[%s3 + $0x30] sm:$0xff]
        %v446 = vld [vmem:[%s3 + $0x38] sm:$0xff]
        %vm447 = vcmask 261120
        %v449 = vsel %vm447, %v439, 0
        %v452 = vsel %vm447, %v440, 0
        %v455 = vsel %vm447, %v441, 0
        %v458 = vsel %vm447, %v442, 0
        %v461 = vsel %vm447, %v443, 0
        %v464 = vsel %vm447, %v444, 0
        %v467 = vsel %vm447, %v445, 0
        %v470 = vsel %vm447, %v446, 0
        %472 = vmatprep.subr.mxu0 0.0
        %473 = vmatpush1.msra.mxu0 0.0
        %474 = vmatprep.subr.mxu0 0.0
        %475 = vmatpush1.msra.mxu0 0.0
        %476 = vmatprep.subr.mxu0 0.0
        %477 = vmatpush1.msra.mxu0 0.0
        %478 = vmatprep.subr.mxu0 0.0
        %479 = vmatpush1.msra.mxu0 0.0
        %480 = vmatprep.subr.mxu0 0.0
        %481 = vmatpush1.msra.mxu0 0.0
        %482 = vmatprep.subr.mxu0 0.0
        %483 = vmatpush1.msra.mxu0 0.0
        %484 = vmatprep.subr.mxu0 0.0
        %485 = vmatpush1.msra.mxu0 0.0
        %486 = vmatprep.subr.mxu0 0.0
        %487 = vmatpush1.msra.mxu0 0.0
        %488 = vmatprep.subr.mxu0 0.0
        %489 = vmatpush1.msra.mxu0 0.0
        %490 = vmatprep.subr.mxu0 0.0
        %491 = vmatpush1.msra.mxu0 0.0
        %492 = vmatprep.subr.mxu0 0.0
        %493 = vmatpush1.msra.mxu0 0.0
        %494 = vmatprep.subr.mxu0 0.0
        %495 = vmatpush1.msra.mxu0 0.0
        %496 = vmatprep.subr.mxu0 0.0
        %497 = vmatpush1.msra.mxu0 %v438
        %498 = vmatprep.subr.mxu0 0.0
        %499 = vmatpush1.msra.mxu0 %v437
        %500 = vmatprep.subr.mxu0 0.0
        %501 = vmatpush1.msra.mxu0 %v436
        %502 = vmatprep.subr.mxu0 0.0
        %503 = vmatpush1.msra.mxu0 %v435
        %504 = vmatprep.subr.mxu0 0.0
        %505 = vmatpush2.msra.mxu0 0.0
        %506 = vmatprep.subr.mxu0 0.0
        %507 = vmatpush2.msra.mxu0 0.0
        %508 = vmatprep.subr.mxu0 0.0
        %509 = vmatpush2.msra.mxu0 0.0
        %510 = vmatprep.subr.mxu0 0.0
        %511 = vmatpush2.msra.mxu0 0.0
        %512 = vmatprep.subr.mxu0 0.0
        %513 = vmatpush2.msra.mxu0 0.0
        %514 = vmatprep.subr.mxu0 0.0
        %515 = vmatpush2.msra.mxu0 0.0
        %516 = vmatprep.subr.mxu0 0.0
        %517 = vmatpush2.msra.mxu0 0.0
        %518 = vmatprep.subr.mxu0 0.0
        %519 = vmatpush2.msra.mxu0 0.0
        %520 = vmatprep.subr.mxu0 0.0
        %521 = vmatpush2.msra.mxu0 0.0
        %522 = vmatprep.subr.mxu0 0.0
        %523 = vmatpush2.msra.mxu0 0.0
        %524 = vmatprep.subr.mxu0 0.0
        %525 = vmatpush2.msra.mxu0 0.0
        %526 = vmatprep.subr.mxu0 0.0
        %527 = vmatpush2.msra.mxu0 0.0
        %528 = vmatprep.subr.mxu0 0.0
        %529 = vmatpush2.msra.mxu0 0.0
        %530 = vmatprep.subr.mxu0 0.0
        %531 = vmatpush2.msra.mxu0 0.0
        %532 = vmatprep.subr.mxu0 0.0
        %533 = vmatpush2.msra.mxu0 0.0
        %534 = vmatprep.subr.mxu0 0.0
        %535 = vmatpush2.msra.mxu0 0.0
        %536 = vmatprep.mubr.f32.mxu0 0.0
        %537 = vmatmul.mubr.f32.gmra.mxu0 %v449
        %v538 = vpop.f32.mrf.mxu0
        %v539 = vadd.f32 0.0, %v538
        %v540 = vpop.f32.mrf.mxu0
        %541 = vmatprep.mubr.f32.mxu0 0.0
        %542 = vmatmul.mubr.f32.gmra.mxu0 %v452
        %v543 = vpop.f32.mrf.mxu0
        %v544 = vadd.f32 0.0, %v543
        %v545 = vpop.f32.mrf.mxu0
        %546 = vmatprep.mubr.f32.mxu0 0.0
        %547 = vmatmul.mubr.f32.gmra.mxu0 %v455
        %v548 = vpop.f32.mrf.mxu0
        %v549 = vadd.f32 0.0, %v548
        %v550 = vpop.f32.mrf.mxu0
        %551 = vmatprep.mubr.f32.mxu0 0.0
        %552 = vmatmul.mubr.f32.gmra.mxu0 %v458
        %v553 = vpop.f32.mrf.mxu0
        %v554 = vadd.f32 0.0, %v553
        %v555 = vpop.f32.mrf.mxu0
        %556 = vmatprep.mubr.f32.mxu0 0.0
        %557 = vmatmul.mubr.f32.gmra.mxu0 %v461
        %v558 = vpop.f32.mrf.mxu0
        %v559 = vadd.f32 0.0, %v558
        %v560 = vpop.f32.mrf.mxu0
        %561 = vmatprep.mubr.f32.mxu0 0.0
        %562 = vmatmul.mubr.f32.gmra.mxu0 %v464
        %v563 = vpop.f32.mrf.mxu0
        %v564 = vadd.f32 0.0, %v563
        %v565 = vpop.f32.mrf.mxu0
        %566 = vmatprep.mubr.f32.mxu0 0.0
        %567 = vmatmul.mubr.f32.gmra.mxu0 %v467
        %v568 = vpop.f32.mrf.mxu0
        %v569 = vadd.f32 0.0, %v568
        %v570 = vpop.f32.mrf.mxu0
        %571 = vmatprep.mubr.f32.mxu0 0.0
        %572 = vmatmul.mubr.f32.gmra.mxu0 %v470
        %v573 = vpop.f32.mrf.mxu0
        %v574 = vadd.f32 0.0, %v573
        %v575 = vpop.f32.mrf.mxu0
        %576 = vdwg.mxu0
        %578 = vset.pattern.permute.xlu0 0
        %579 = vperm.xlu0 %578, %v539
        %v580 = vpop.permute.xlu0 %579
        %583 = vset.pattern.permute.xlu0 0
        %584 = vperm.xlu0 %583, %v544
        %v585 = vpop.permute.xlu0 %584
        %588 = vset.pattern.permute.xlu0 0
        %589 = vperm.xlu0 %588, %v549
        %v590 = vpop.permute.xlu0 %589
        %593 = vset.pattern.permute.xlu0 0
        %594 = vperm.xlu0 %593, %v554
        %v595 = vpop.permute.xlu0 %594
        %598 = vset.pattern.permute.xlu0 0
        %599 = vperm.xlu0 %598, %v559
        %v600 = vpop.permute.xlu0 %599
        %603 = vset.pattern.permute.xlu0 0
        %604 = vperm.xlu0 %603, %v564
        %v605 = vpop.permute.xlu0 %604
        %608 = vset.pattern.permute.xlu0 0
        %609 = vperm.xlu0 %608, %v569
        %v610 = vpop.permute.xlu0 %609
        %613 = vset.pattern.permute.xlu0 0
        %614 = vperm.xlu0 %613, %v574
        %v615 = vpop.permute.xlu0 %614
        %v617 = vsub.f32 %v293, %v580
        %v618 = vsub.f32 %v294, %v580
        %v619 = vsub.f32 %v295, %v585
        %v620 = vsub.f32 %v296, %v585
        %v621 = vsub.f32 %v297, %v590
        %v622 = vsub.f32 %v298, %v590
        %v623 = vsub.f32 %v299, %v595
        %v624 = vsub.f32 %v300, %v595
        %v625 = vsub.f32 %v301, %v600
        %v626 = vsub.f32 %v302, %v600
        %v627 = vsub.f32 %v303, %v605
        %v628 = vsub.f32 %v304, %v605
        %v629 = vsub.f32 %v305, %v610
        %v630 = vsub.f32 %v306, %v610
        %v631 = vsub.f32 %v307, %v615
        %v632 = vsub.f32 %v308, %v615
        %v633 = vmul.f32 %v617, %v617
        %v634 = vmul.f32 %v618, %v618
        %v635 = vmul.f32 %v619, %v619
        %v636 = vmul.f32 %v620, %v620
        %v637 = vmul.f32 %v621, %v621
        %v638 = vmul.f32 %v622, %v622
        %v639 = vmul.f32 %v623, %v623
        %v640 = vmul.f32 %v624, %v624
        %v641 = vmul.f32 %v625, %v625
        %v642 = vmul.f32 %v626, %v626
        %v643 = vmul.f32 %v627, %v627
        %v644 = vmul.f32 %v628, %v628
        %v645 = vmul.f32 %v629, %v629
        %v646 = vmul.f32 %v630, %v630
        %v647 = vmul.f32 %v631, %v631
        %v648 = vmul.f32 %v632, %v632
        %v649 = vadd.f32 %v633, %v634
        %650 = vadd.xlane.f32.xlu0 %v649
        %v651 = vpop.xlane.xlu0 %650
        %v652 = vadd.f32 %v635, %v636
        %653 = vadd.xlane.f32.xlu0 %v652
        %v654 = vpop.xlane.xlu0 %653
        %v655 = vadd.f32 %v637, %v638
        %656 = vadd.xlane.f32.xlu0 %v655
        %v657 = vpop.xlane.xlu0 %656
        %v658 = vadd.f32 %v639, %v640
        %659 = vadd.xlane.f32.xlu0 %v658
        %v660 = vpop.xlane.xlu0 %659
        %v661 = vadd.f32 %v641, %v642
        %662 = vadd.xlane.f32.xlu0 %v661
        %v663 = vpop.xlane.xlu0 %662
        %v664 = vadd.f32 %v643, %v644
        %665 = vadd.xlane.f32.xlu0 %v664
        %v666 = vpop.xlane.xlu0 %665
        %v667 = vadd.f32 %v645, %v646
        %668 = vadd.xlane.f32.xlu0 %v667
        %v669 = vpop.xlane.xlu0 %668
        %v670 = vadd.f32 %v647, %v648
        %671 = vadd.xlane.f32.xlu0 %v670
        %v672 = vpop.xlane.xlu0 %671
        %673 = vmatprep.subr.mxu0 0.0
        %674 = vmatpush1.msra.mxu0 0.0
        %675 = vmatprep.subr.mxu0 0.0
        %676 = vmatpush1.msra.mxu0 0.0
        %677 = vmatprep.subr.mxu0 0.0
        %678 = vmatpush1.msra.mxu0 0.0
        %679 = vmatprep.subr.mxu0 0.0
        %680 = vmatpush1.msra.mxu0 0.0
        %681 = vmatprep.subr.mxu0 0.0
        %682 = vmatpush1.msra.mxu0 0.0
        %683 = vmatprep.subr.mxu0 0.0
        %684 = vmatpush1.msra.mxu0 0.0
        %685 = vmatprep.subr.mxu0 0.0
        %686 = vmatpush1.msra.mxu0 0.0
        %687 = vmatprep.subr.mxu0 0.0
        %688 = vmatpush1.msra.mxu0 0.0
        %689 = vmatprep.subr.mxu0 0.0
        %690 = vmatpush1.msra.mxu0 %v672
        %691 = vmatprep.subr.mxu0 0.0
        %692 = vmatpush1.msra.mxu0 %v669
        %693 = vmatprep.subr.mxu0 0.0
        %694 = vmatpush1.msra.mxu0 %v666
        %695 = vmatprep.subr.mxu0 0.0
        %696 = vmatpush1.msra.mxu0 %v663
        %697 = vmatprep.subr.mxu0 0.0
        %698 = vmatpush1.msra.mxu0 %v660
        %699 = vmatprep.subr.mxu0 0.0
        %700 = vmatpush1.msra.mxu0 %v657
        %701 = vmatprep.subr.mxu0 0.0
        %702 = vmatpush1.msra.mxu0 %v654
        %703 = vmatprep.subr.mxu0 0.0
        %704 = vmatpush1.msra.mxu0 %v651
        %705 = vmatprep.subr.mxu0 0.0
        %706 = vmatpush2.msra.mxu0 0.0
        %707 = vmatprep.subr.mxu0 0.0
        %708 = vmatpush2.msra.mxu0 0.0
        %709 = vmatprep.subr.mxu0 0.0
        %710 = vmatpush2.msra.mxu0 0.0
        %711 = vmatprep.subr.mxu0 0.0
        %712 = vmatpush2.msra.mxu0 0.0
        %713 = vmatprep.subr.mxu0 0.0
        %714 = vmatpush2.msra.mxu0 0.0
        %715 = vmatprep.subr.mxu0 0.0
        %716 = vmatpush2.msra.mxu0 0.0
        %717 = vmatprep.subr.mxu0 0.0
        %718 = vmatpush2.msra.mxu0 0.0
        %719 = vmatprep.subr.mxu0 0.0
        %720 = vmatpush2.msra.mxu0 0.0
        %721 = vmatprep.subr.mxu0 0.0
        %722 = vmatpush2.msra.mxu0 0.0
        %723 = vmatprep.subr.mxu0 0.0
        %724 = vmatpush2.msra.mxu0 0.0
        %725 = vmatprep.subr.mxu0 0.0
        %726 = vmatpush2.msra.mxu0 0.0
        %727 = vmatprep.subr.mxu0 0.0
        %728 = vmatpush2.msra.mxu0 0.0
        %729 = vmatprep.subr.mxu0 0.0
        %730 = vmatpush2.msra.mxu0 0.0
        %731 = vmatprep.subr.mxu0 0.0
        %732 = vmatpush2.msra.mxu0 0.0
        %733 = vmatprep.subr.mxu0 0.0
        %734 = vmatpush2.msra.mxu0 0.0
        %735 = vmatprep.subr.mxu0 0.0
        %736 = vmatpush2.msra.mxu0 0.0
        %737 = vmatprep.mubr.f32.mxu0 0.0
        %738 = vmatmul.mubr.f32.gmra.mxu0 %v339
        %v739 = vpop.f32.mrf.mxu0
        %v740 = vadd.f32 0.0, %v739
        %v741 = vpop.f32.mrf.mxu0
        %742 = vmatprep.mubr.f32.mxu0 0.0
        %743 = vmatmul.mubr.f32.gmra.mxu0 %v342
        %v744 = vpop.f32.mrf.mxu0
        %v745 = vadd.f32 0.0, %v744
        %v746 = vpop.f32.mrf.mxu0
        %747 = vmatprep.mubr.f32.mxu0 0.0
        %748 = vmatmul.mubr.f32.gmra.mxu0 %v345
        %v749 = vpop.f32.mrf.mxu0
        %v750 = vadd.f32 0.0, %v749
        %v751 = vpop.f32.mrf.mxu0
        %752 = vmatprep.mubr.f32.mxu0 0.0
        %753 = vmatmul.mubr.f32.gmra.mxu0 %v348
        %v754 = vpop.f32.mrf.mxu0
        %v755 = vadd.f32 0.0, %v754
        %v756 = vpop.f32.mrf.mxu0
        %757 = vdwg.mxu0
        %v758 = vmul.f32 %v740, 0.001953125
        %v759 = vmul.f32 %v745, 0.001953125
        %v760 = vmul.f32 %v750, 0.001953125
        %v761 = vmul.f32 %v755, 0.001953125
        %v762 = vadd.f32 %v758, 1e-05
        %v763 = vadd.f32 %v759, 1e-05
        %v764 = vadd.f32 %v760, 1e-05
        %v765 = vadd.f32 %v761, 1e-05
        %v766 = vrsqrt.pop %v762
        %v767 = vrsqrt.pop %v763
        %v768 = vrsqrt.pop %v764
        %v769 = vrsqrt.pop %v765
        %770 = vmatprep.subr.mxu0 0.0
        %771 = vmatpush1.msra.mxu0 0.0
        %772 = vmatprep.subr.mxu0 0.0
        %773 = vmatpush1.msra.mxu0 0.0
        %774 = vmatprep.subr.mxu0 0.0
        %775 = vmatpush1.msra.mxu0 0.0
        %776 = vmatprep.subr.mxu0 0.0
        %777 = vmatpush1.msra.mxu0 0.0
        %778 = vmatprep.subr.mxu0 0.0
        %779 = vmatpush1.msra.mxu0 0.0
        %780 = vmatprep.subr.mxu0 0.0
        %781 = vmatpush1.msra.mxu0 0.0
        %782 = vmatprep.subr.mxu0 0.0
        %783 = vmatpush1.msra.mxu0 0.0
        %784 = vmatprep.subr.mxu0 0.0
        %785 = vmatpush1.msra.mxu0 0.0
        %786 = vmatprep.subr.mxu0 0.0
        %787 = vmatpush1.msra.mxu0 0.0
        %788 = vmatprep.subr.mxu0 0.0
        %789 = vmatpush1.msra.mxu0 0.0
        %790 = vmatprep.subr.mxu0 0.0
        %791 = vmatpush1.msra.mxu0 0.0
        %792 = vmatprep.subr.mxu0 0.0
        %793 = vmatpush1.msra.mxu0 0.0
        %794 = vmatprep.subr.mxu0 0.0
        %795 = vmatpush1.msra.mxu0 %v769
        %796 = vmatprep.subr.mxu0 0.0
        %797 = vmatpush1.msra.mxu0 %v768
        %798 = vmatprep.subr.mxu0 0.0
        %799 = vmatpush1.msra.mxu0 %v767
        %800 = vmatprep.subr.mxu0 0.0
        %801 = vmatpush1.msra.mxu0 %v766
        %802 = vmatprep.subr.mxu0 0.0
        %803 = vmatpush2.msra.mxu0 0.0
        %804 = vmatprep.subr.mxu0 0.0
        %805 = vmatpush2.msra.mxu0 0.0
        %806 = vmatprep.subr.mxu0 0.0
        %807 = vmatpush2.msra.mxu0 0.0
        %808 = vmatprep.subr.mxu0 0.0
        %809 = vmatpush2.msra.mxu0 0.0
        %810 = vmatprep.subr.mxu0 0.0
        %811 = vmatpush2.msra.mxu0 0.0
        %812 = vmatprep.subr.mxu0 0.0
        %813 = vmatpush2.msra.mxu0 0.0
        %814 = vmatprep.subr.mxu0 0.0
        %815 = vmatpush2.msra.mxu0 0.0
        %816 = vmatprep.subr.mxu0 0.0
        %817 = vmatpush2.msra.mxu0 0.0
        %818 = vmatprep.subr.mxu0 0.0
        %819 = vmatpush2.msra.mxu0 0.0
        %820 = vmatprep.subr.mxu0 0.0
        %821 = vmatpush2.msra.mxu0 0.0
        %822 = vmatprep.subr.mxu0 0.0
        %823 = vmatpush2.msra.mxu0 0.0
        %824 = vmatprep.subr.mxu0 0.0
        %825 = vmatpush2.msra.mxu0 0.0
        %826 = vmatprep.subr.mxu0 0.0
        %827 = vmatpush2.msra.mxu0 0.0
        %828 = vmatprep.subr.mxu0 0.0
        %829 = vmatpush2.msra.mxu0 0.0
        %830 = vmatprep.subr.mxu0 0.0
        %831 = vmatpush2.msra.mxu0 0.0
        %832 = vmatprep.subr.mxu0 0.0
        %833 = vmatpush2.msra.mxu0 0.0
        %834 = vmatprep.mubr.f32.mxu0 0.0
        %835 = vmatmul.mubr.f32.gmra.mxu0 %v449
        %v836 = vpop.f32.mrf.mxu0
        %v837 = vadd.f32 0.0, %v836
        %v838 = vpop.f32.mrf.mxu0
        %839 = vmatprep.mubr.f32.mxu0 0.0
        %840 = vmatmul.mubr.f32.gmra.mxu0 %v452
        %v841 = vpop.f32.mrf.mxu0
        %v842 = vadd.f32 0.0, %v841
        %v843 = vpop.f32.mrf.mxu0
        %844 = vmatprep.mubr.f32.mxu0 0.0
        %845 = vmatmul.mubr.f32.gmra.mxu0 %v455
        %v846 = vpop.f32.mrf.mxu0
        %v847 = vadd.f32 0.0, %v846
        %v848 = vpop.f32.mrf.mxu0
        %849 = vmatprep.mubr.f32.mxu0 0.0
        %850 = vmatmul.mubr.f32.gmra.mxu0 %v458
        %v851 = vpop.f32.mrf.mxu0
        %v852 = vadd.f32 0.0, %v851
        %v853 = vpop.f32.mrf.mxu0
        %854 = vmatprep.mubr.f32.mxu0 0.0
        %855 = vmatmul.mubr.f32.gmra.mxu0 %v461
        %v856 = vpop.f32.mrf.mxu0
        %v857 = vadd.f32 0.0, %v856
        %v858 = vpop.f32.mrf.mxu0
        %859 = vmatprep.mubr.f32.mxu0 0.0
        %860 = vmatmul.mubr.f32.gmra.mxu0 %v464
        %v861 = vpop.f32.mrf.mxu0
        %v862 = vadd.f32 0.0, %v861
        %v863 = vpop.f32.mrf.mxu0
        %864 = vmatprep.mubr.f32.mxu0 0.0
        %865 = vmatmul.mubr.f32.gmra.mxu0 %v467
        %v866 = vpop.f32.mrf.mxu0
        %v867 = vadd.f32 0.0, %v866
        %v868 = vpop.f32.mrf.mxu0
        %869 = vmatprep.mubr.f32.mxu0 0.0
        %870 = vmatmul.mubr.f32.gmra.mxu0 %v470
        %v871 = vpop.f32.mrf.mxu0
        %v872 = vadd.f32 0.0, %v871
        %v873 = vpop.f32.mrf.mxu0
        %874 = vdwg.mxu0
        %v875 = vld [vmem:[%s1] sm:$0xff]
        %v876 = vld [vmem:[%s1 + $0x8] sm:$0xff]
        %v877 = vld [vmem:[%s1 + $0x10] sm:$0xff]
        %v878 = vld [vmem:[%s1 + $0x18] sm:$0xff]
        %v879 = vld [vmem:[%s1 + $0x20] sm:$0xff]
        %v880 = vld [vmem:[%s1 + $0x28] sm:$0xff]
        %v881 = vld [vmem:[%s1 + $0x30] sm:$0xff]
        %v882 = vld [vmem:[%s1 + $0x38] sm:$0xff]
        %v883 = vmul.f32 %v837, %v875
        %v884 = vmul.f32 %v842, %v876
        %v885 = vmul.f32 %v847, %v877
        %v886 = vmul.f32 %v852, %v878
        %v887 = vmul.f32 %v857, %v879
        %v888 = vmul.f32 %v862, %v880
        %v889 = vmul.f32 %v867, %v881
        %v890 = vmul.f32 %v872, %v882
        %892 = vset.pattern.permute.xlu0 0
        %893 = vperm.xlu0 %892, %v883
        %v894 = vpop.permute.xlu0 %893
        %897 = vset.pattern.permute.xlu0 0
        %898 = vperm.xlu0 %897, %v884
        %v899 = vpop.permute.xlu0 %898
        %902 = vset.pattern.permute.xlu0 0
        %903 = vperm.xlu0 %902, %v885
        %v904 = vpop.permute.xlu0 %903
        %907 = vset.pattern.permute.xlu0 0
        %908 = vperm.xlu0 %907, %v886
        %v909 = vpop.permute.xlu0 %908
        %912 = vset.pattern.permute.xlu0 0
        %913 = vperm.xlu0 %912, %v887
        %v914 = vpop.permute.xlu0 %913
        %917 = vset.pattern.permute.xlu0 0
        %918 = vperm.xlu0 %917, %v888
        %v919 = vpop.permute.xlu0 %918
        %922 = vset.pattern.permute.xlu0 0
        %923 = vperm.xlu0 %922, %v889
        %v924 = vpop.permute.xlu0 %923
        %927 = vset.pattern.permute.xlu0 0
        %928 = vperm.xlu0 %927, %v890
        %v929 = vpop.permute.xlu0 %928
        %v931 = vmul.f32 %v617, %v894
        %v932 = vmul.f32 %v618, %v894
        %v933 = vmul.f32 %v619, %v899
        %v934 = vmul.f32 %v620, %v899
        %v935 = vmul.f32 %v621, %v904
        %v936 = vmul.f32 %v622, %v904
        %v937 = vmul.f32 %v623, %v909
        %v938 = vmul.f32 %v624, %v909
        %v939 = vmul.f32 %v625, %v914
        %v940 = vmul.f32 %v626, %v914
        %v941 = vmul.f32 %v627, %v919
        %v942 = vmul.f32 %v628, %v919
        %v943 = vmul.f32 %v629, %v924
        %v944 = vmul.f32 %v630, %v924
        %v945 = vmul.f32 %v631, %v929
        %v946 = vmul.f32 %v632, %v929
        %v947 = vld [vmem:[%s2] sm:$0xff]
        %v948 = vld [vmem:[%s2 + $0x8] sm:$0xff]
        %v949 = vld [vmem:[%s2 + $0x10] sm:$0xff]
        %v950 = vld [vmem:[%s2 + $0x18] sm:$0xff]
        %v951 = vld [vmem:[%s2 + $0x20] sm:$0xff]
        %v952 = vld [vmem:[%s2 + $0x28] sm:$0xff]
        %v953 = vld [vmem:[%s2 + $0x30] sm:$0xff]
        %v954 = vld [vmem:[%s2 + $0x38] sm:$0xff]
        %956 = vset.pattern.permute.xlu0 0
        %957 = vperm.xlu0 %956, %v947
        %v958 = vpop.permute.xlu0 %957
        %961 = vset.pattern.permute.xlu0 0
        %962 = vperm.xlu0 %961, %v948
        %v963 = vpop.permute.xlu0 %962
        %966 = vset.pattern.permute.xlu0 0
        %967 = vperm.xlu0 %966, %v949
        %v968 = vpop.permute.xlu0 %967
        %971 = vset.pattern.permute.xlu0 0
        %972 = vperm.xlu0 %971, %v950
        %v973 = vpop.permute.xlu0 %972
        %976 = vset.pattern.permute.xlu0 0
        %977 = vperm.xlu0 %976, %v951
        %v978 = vpop.permute.xlu0 %977
        %981 = vset.pattern.permute.xlu0 0
        %982 = vperm.xlu0 %981, %v952
        %v983 = vpop.permute.xlu0 %982
        %986 = vset.pattern.permute.xlu0 0
        %987 = vperm.xlu0 %986, %v953
        %v988 = vpop.permute.xlu0 %987
        %991 = vset.pattern.permute.xlu0 0
        %992 = vperm.xlu0 %991, %v954
        %v993 = vpop.permute.xlu0 %992
        %v995 = vadd.f32 %v931, %v958
        %v996 = vadd.f32 %v932, %v958
        %v997 = vadd.f32 %v933, %v963
        %v998 = vadd.f32 %v934, %v963
        %v999 = vadd.f32 %v935, %v968
        %v1000 = vadd.f32 %v936, %v968
        %v1001 = vadd.f32 %v937, %v973
        %v1002 = vadd.f32 %v938, %v973
        %v1003 = vadd.f32 %v939, %v978
        %v1004 = vadd.f32 %v940, %v978
        %v1005 = vadd.f32 %v941, %v983
        %v1006 = vadd.f32 %v942, %v983
        %v1007 = vadd.f32 %v943, %v988
        %v1008 = vadd.f32 %v944, %v988
        %v1009 = vadd.f32 %v945, %v993
        %v1010 = vadd.f32 %v946, %v993
        %v1011 = vsub.f32 0.0, %v995
        %v1012 = vsub.f32 0.0, %v996
        %v1013 = vsub.f32 0.0, %v997
        %v1014 = vsub.f32 0.0, %v998
        %v1015 = vsub.f32 0.0, %v999
        %v1016 = vsub.f32 0.0, %v1000
        %v1017 = vsub.f32 0.0, %v1001
        %v1018 = vsub.f32 0.0, %v1002
        %v1019 = vsub.f32 0.0, %v1003
        %v1020 = vsub.f32 0.0, %v1004
        %v1021 = vsub.f32 0.0, %v1005
        %v1022 = vsub.f32 0.0, %v1006
        %v1023 = vsub.f32 0.0, %v1007
        %v1024 = vsub.f32 0.0, %v1008
        %v1025 = vsub.f32 0.0, %v1009
        %v1026 = vsub.f32 0.0, %v1010
        %v1027 = vmul.f32 %v1011, 1.442695
        %v1028 = vpow.pop %v1027
        %v1029 = vmul.f32 %v1012, 1.442695
        %v1030 = vpow.pop %v1029
        %v1031 = vmul.f32 %v1013, 1.442695
        %v1032 = vpow.pop %v1031
        %v1033 = vmul.f32 %v1014, 1.442695
        %v1034 = vpow.pop %v1033
        %v1035 = vmul.f32 %v1015, 1.442695
        %v1036 = vpow.pop %v1035
        %v1037 = vmul.f32 %v1016, 1.442695
        %v1038 = vpow.pop %v1037
        %v1039 = vmul.f32 %v1017, 1.442695
        %v1040 = vpow.pop %v1039
        %v1041 = vmul.f32 %v1018, 1.442695
        %v1042 = vpow.pop %v1041
        %v1043 = vmul.f32 %v1019, 1.442695
        %v1044 = vpow.pop %v1043
        %v1045 = vmul.f32 %v1020, 1.442695
        %v1046 = vpow.pop %v1045
        %v1047 = vmul.f32 %v1021, 1.442695
        %v1048 = vpow.pop %v1047
        %v1049 = vmul.f32 %v1022, 1.442695
        %v1050 = vpow.pop %v1049
        %v1051 = vmul.f32 %v1023, 1.442695
        %v1052 = vpow.pop %v1051
        %v1053 = vmul.f32 %v1024, 1.442695
        %v1054 = vpow.pop %v1053
        %v1055 = vmul.f32 %v1025, 1.442695
        %v1056 = vpow.pop %v1055
        %v1057 = vmul.f32 %v1026, 1.442695
        %v1058 = vpow.pop %v1057
        %v1059 = vadd.f32 %v1028, 1.0
        %v1060 = vadd.f32 %v1030, 1.0
        %v1061 = vadd.f32 %v1032, 1.0
        %v1062 = vadd.f32 %v1034, 1.0
        %v1063 = vadd.f32 %v1036, 1.0
        %v1064 = vadd.f32 %v1038, 1.0
        %v1065 = vadd.f32 %v1040, 1.0
        %v1066 = vadd.f32 %v1042, 1.0
        %v1067 = vadd.f32 %v1044, 1.0
        %v1068 = vadd.f32 %v1046, 1.0
        %v1069 = vadd.f32 %v1048, 1.0
        %v1070 = vadd.f32 %v1050, 1.0
        %v1071 = vadd.f32 %v1052, 1.0
        %v1072 = vadd.f32 %v1054, 1.0
        %v1073 = vadd.f32 %v1056, 1.0
        %v1074 = vadd.f32 %v1058, 1.0
        %v1075 = vrcp.pop %v1059
        %v1076 = vrcp.pop %v1060
        %v1077 = vrcp.pop %v1061
        %v1078 = vrcp.pop %v1062
        %v1079 = vrcp.pop %v1063
        %v1080 = vrcp.pop %v1064
        %v1081 = vrcp.pop %v1065
        %v1082 = vrcp.pop %v1066
        %v1083 = vrcp.pop %v1067
        %v1084 = vrcp.pop %v1068
        %v1085 = vrcp.pop %v1069
        %v1086 = vrcp.pop %v1070
        %v1087 = vrcp.pop %v1071
        %v1088 = vrcp.pop %v1072
        %v1089 = vrcp.pop %v1073
        %v1090 = vrcp.pop %v1074
        %v1091 = vmul.f32 %v995, %v1075
        %v1092 = vmul.f32 %v996, %v1076
        %v1093 = vmul.f32 %v997, %v1077
        %v1094 = vmul.f32 %v998, %v1078
        %v1095 = vmul.f32 %v999, %v1079
        %v1096 = vmul.f32 %v1000, %v1080
        %v1097 = vmul.f32 %v1001, %v1081
        %v1098 = vmul.f32 %v1002, %v1082
        %v1099 = vmul.f32 %v1003, %v1083
        %v1100 = vmul.f32 %v1004, %v1084
        %v1101 = vmul.f32 %v1005, %v1085
        %v1102 = vmul.f32 %v1006, %v1086
        %v1103 = vmul.f32 %v1007, %v1087
        %v1104 = vmul.f32 %v1008, %v1088
        %v1105 = vmul.f32 %v1009, %v1089
        %v1106 = vmul.f32 %v1010, %v1090
        %v1107 = vpack.c.bf16 %v1093, %v1091
        %v1108 = vpack.c.bf16 %v1094, %v1092
        %v1109 = vpack.c.bf16 %v1097, %v1095
        %v1110 = vpack.c.bf16 %v1098, %v1096
        %v1111 = vpack.c.bf16 %v1101, %v1099
        %v1112 = vpack.c.bf16 %v1102, %v1100
        %v1113 = vpack.c.bf16 %v1105, %v1103
        %v1114 = vpack.c.bf16 %v1106, %v1104
        %v1115 = vld [vmem:[%s5] sm:$0xf]
        %v1116 = vld [vmem:[%s5 + $0x4] sm:$0xf]
        %v1117 = vld [vmem:[%s5 + $0x8] sm:$0xf]
        %v1118 = vld [vmem:[%s5 + $0xc] sm:$0xf]
        %v1119 = vld [vmem:[%s5 + $0x10] sm:$0xf]
        %v1120 = vld [vmem:[%s5 + $0x14] sm:$0xf]
        %v1121 = vld [vmem:[%s5 + $0x18] sm:$0xf]
        %v1122 = vld [vmem:[%s5 + $0x1c] sm:$0xf]
        %v1123 = vld [vmem:[%s5 + $0x20] sm:$0xf]
        %v1133 = vunpack.c.l.b16 %v1115
        %v1134 = vunpack.c.l.b16 %v1116
        %v1135 = vunpack.c.l.b16 %v1117
        %v1136 = vunpack.c.l.b16 %v1118
        %v1137 = vunpack.c.l.b16 %v1119
        %v1138 = vunpack.c.l.b16 %v1120
        %v1139 = vunpack.c.l.b16 %v1121
        %v1140 = vunpack.c.l.b16 %v1122
        %v1141 = vunpack.c.l.b16 %v1123
        %v1142 = vpack.c.b16 %v1134, %v1133
        %v1143 = vpack.c.b16 %v1136, %v1135
        %v1144 = vpack.c.b16 %v1138, %v1137
        %v1145 = vpack.c.b16 %v1140, %v1139
        %v1146 = vpack.c.b16 %v1141, %v1141
        %v1148 = vsel %vm337, %v1142, 0
        %v1151 = vsel %vm337, %v1143, 0
        %v1154 = vsel %vm337, %v1144, 0
        %v1157 = vsel %vm337, %v1145, 0
        %v1160 = vsel %vm337, %v1146, 0
        %1162 = vmatprep.subr.bf16.mxu0 0
        %1163 = vmatpush1.bf16.msra.mxu0 0
        %1164 = vmatprep.subr.bf16.mxu0 0
        %1165 = vmatpush1.bf16.msra.mxu0 0
        %1166 = vmatprep.subr.bf16.mxu0 0
        %1167 = vmatpush1.bf16.msra.mxu0 0
        %1168 = vmatprep.subr.bf16.mxu0 0
        %1169 = vmatpush1.bf16.msra.mxu0 0
        %1170 = vmatprep.subr.bf16.mxu0 %v1114
        %1171 = vmatpush1.bf16.msra.mxu0 %v1113
        %1172 = vmatprep.subr.bf16.mxu0 %v1112
        %1173 = vmatpush1.bf16.msra.mxu0 %v1111
        %1174 = vmatprep.subr.bf16.mxu0 %v1110
        %1175 = vmatpush1.bf16.msra.mxu0 %v1109
        %1176 = vmatprep.subr.bf16.mxu0 %v1108
        %1177 = vmatpush1.bf16.msra.mxu0 %v1107
        %1178 = vmatprep.subr.bf16.mxu0 0
        %1179 = vmatpush2.bf16.msra.mxu0 0
        %1180 = vmatprep.subr.bf16.mxu0 0
        %1181 = vmatpush2.bf16.msra.mxu0 0
        %1182 = vmatprep.subr.bf16.mxu0 0
        %1183 = vmatpush2.bf16.msra.mxu0 0
        %1184 = vmatprep.subr.bf16.mxu0 0
        %1185 = vmatpush2.bf16.msra.mxu0 0
        %1186 = vmatprep.subr.bf16.mxu0 0
        %1187 = vmatpush2.bf16.msra.mxu0 0
        %1188 = vmatprep.subr.bf16.mxu0 0
        %1189 = vmatpush2.bf16.msra.mxu0 0
        %1190 = vmatprep.subr.bf16.mxu0 0
        %1191 = vmatpush2.bf16.msra.mxu0 0
        %1192 = vmatprep.subr.bf16.mxu0 0
        %1193 = vmatpush2.bf16.msra.mxu0 0
        %1194 = vmatprep.mubr.bf16.mxu0 0
        %1195 = vmatmul.mubr.bf16.gmra.mxu0 %v1148
        %v1196 = vpop.f32.mrf.mxu0
        %v1197 = vadd.f32 0.0, %v1196
        %v1198 = vpop.f32.mrf.mxu0
        %v1199 = vadd.f32 0.0, %v1198
        %v1200 = vpop.f32.mrf.mxu0
        %v1201 = vadd.f32 0.0, %v1200
        %v1202 = vpop.f32.mrf.mxu0
        %v1203 = vadd.f32 0.0, %v1202
        %1204 = vmatprep.mubr.bf16.mxu0 0
        %1205 = vmatmul.mubr.bf16.gmra.mxu0 %v1151
        %v1206 = vpop.f32.mrf.mxu0
        %v1207 = vadd.f32 0.0, %v1206
        %v1208 = vpop.f32.mrf.mxu0
        %v1209 = vadd.f32 0.0, %v1208
        %v1210 = vpop.f32.mrf.mxu0
        %v1211 = vadd.f32 0.0, %v1210
        %v1212 = vpop.f32.mrf.mxu0
        %v1213 = vadd.f32 0.0, %v1212
        %1214 = vmatprep.mubr.bf16.mxu0 0
        %1215 = vmatmul.mubr.bf16.gmra.mxu0 %v1154
        %v1216 = vpop.f32.mrf.mxu0
        %v1217 = vadd.f32 0.0, %v1216
        %v1218 = vpop.f32.mrf.mxu0
        %v1219 = vadd.f32 0.0, %v1218
        %v1220 = vpop.f32.mrf.mxu0
        %v1221 = vadd.f32 0.0, %v1220
        %v1222 = vpop.f32.mrf.mxu0
        %v1223 = vadd.f32 0.0, %v1222
        %1224 = vmatprep.mubr.bf16.mxu0 0
        %1225 = vmatmul.mubr.bf16.gmra.mxu0 %v1157
        %v1226 = vpop.f32.mrf.mxu0
        %v1227 = vadd.f32 0.0, %v1226
        %v1228 = vpop.f32.mrf.mxu0
        %v1229 = vadd.f32 0.0, %v1228
        %v1230 = vpop.f32.mrf.mxu0
        %v1231 = vadd.f32 0.0, %v1230
        %v1232 = vpop.f32.mrf.mxu0
        %v1233 = vadd.f32 0.0, %v1232
        %1234 = vmatprep.mubr.bf16.mxu0 0
        %1235 = vmatmul.mubr.bf16.gmra.mxu0 %v1160
        %v1236 = vpop.f32.mrf.mxu0
        %v1237 = vadd.f32 0.0, %v1236
        %v1238 = vpop.f32.mrf.mxu0
        %v1239 = vadd.f32 0.0, %v1238
        %v1240 = vpop.f32.mrf.mxu0
        %v1241 = vpop.f32.mrf.mxu0
        %1242 = vdwg.mxu0
        %v1243 = vlaneseq
        %v1244 = vand.u32 %v1243, 127
        %v1245 = vadd.s32 %v1244, 128
        %vm1246 = vcmp.lt.s32.totalorder %v1244, 0
        %v1247 = vsub.s32 0, %v1244
        %v1248 = vsel %vm1246, %v1247, %v1244
        %v1249 = vshrl.u32 %v1248, 4
        %v1250 = vand.u32 %v1248, 15
        %v1251 = vsub.s32 0, %v1250
        %v1252 = vsel %vm1246, %v1251, %v1250
        %vm1253 = vcmp.lt.s32.totalorder %v1245, 0
        %v1254 = vsub.s32 0, %v1245
        %v1255 = vsel %vm1253, %v1254, %v1245
        %v1256 = vshrl.u32 %v1255, 4
        %v1257 = vand.u32 %v1255, 15
        %v1258 = vsub.s32 0, %v1257
        %v1259 = vsel %vm1253, %v1258, %v1257
        %vm1260 = vcmp.ne.s32.totalorder %v1252, 0
        %vm1261 = vcmp.ne.s32.totalorder %v1259, 0
        %vm1262 = vcmp.lt.s32.totalorder %v1252, 0
        %vm1263 = vcmp.lt.s32.totalorder %v1259, 0
        %vm1264 = vmand %vm1262, %vm1260
        %vm1265 = vmand %vm1263, %vm1261
        %v1266 = vadd.s32 %v1252, 16
        %v1267 = vadd.s32 %v1259, 16
        %v1268 = vsel %vm1264, %v1266, %v1252
        %v1269 = vsel %vm1265, %v1267, %v1259
        %vm1270 = vcmp.ge.s32.totalorder %v1244, 16
        %vm1271 = vcmp.ge.s32.totalorder %v1245, 16
        %vm1272 = vcmp.lt.s32.totalorder %v1244, 240
        %vm1273 = vcmp.lt.s32.totalorder %v1245, 240
        %vm1274 = vcmp.ge.s32.totalorder %v1268, 1
        %vm1275 = vcmp.ge.s32.totalorder %v1269, 1
        %vm1276 = vcmp.le.s32.totalorder %v1268, 14
        %vm1277 = vcmp.le.s32.totalorder %v1269, 14
        %1278 = vrot.lane.b32.xlu0 %v1197, 17
        %v1279 = vpop.permute.xlu0 %1278
        %1280 = vrot.lane.b32.xlu0 %v1199, 17
        %v1281 = vpop.permute.xlu0 %1280
        %vm1282 = vcmp.lt.s32.totalorder %v1244, 17
        %v1283 = vsel %vm1282, %v1279, %v1281
        %v1284 = vsel %vm1282, %v1281, %v1279
        %vm1285 = vmand %vm1270, %vm1274
        %vm1286 = vmand %vm1271, %vm1275
        %v1287 = vsel %vm1285, 1, 0
        %v1288 = vsel %vm1286, 1, 0
        %vm1289 = vcmp.eq.s32.totalorder %v1287, 1
        %vm1290 = vcmp.eq.s32.totalorder %v1288, 1
        %v1291 = vsel %vm1289, %v1284, 0.0
        %v1292 = vsel %vm1290, %v1283, 0.0
        %v1293 = vadd.f32 %v1217, %v1291
        %v1294 = vadd.f32 %v1219, %v1292
        %1295 = vrot.lane.b32.xlu0 %v1201, 16
        %v1296 = vpop.permute.xlu0 %1295
        %1297 = vrot.lane.b32.xlu0 %v1203, 16
        %v1298 = vpop.permute.xlu0 %1297
        %vm1299 = vcmp.lt.s32.totalorder %v1244, 16
        %v1300 = vsel %vm1299, %v1296, %v1298
        %v1301 = vsel %vm1299, %v1298, %v1296
        %v1302 = vsel %vm1270, 1, 0
        %v1303 = vsel %vm1271, 1, 0
        %vm1304 = vcmp.eq.s32.totalorder %v1302, 1
        %vm1305 = vcmp.eq.s32.totalorder %v1303, 1
        %v1306 = vsel %vm1304, %v1301, 0.0
        %v1307 = vsel %vm1305, %v1300, 0.0
        %v1308 = vadd.f32 %v1293, %v1306
        %v1309 = vadd.f32 %v1294, %v1307
        %1310 = vrot.lane.b32.xlu0 %v1207, 15
        %v1311 = vpop.permute.xlu0 %1310
        %1312 = vrot.lane.b32.xlu0 %v1209, 15
        %v1313 = vpop.permute.xlu0 %1312
        %vm1314 = vcmp.lt.s32.totalorder %v1244, 15
        %v1315 = vsel %vm1314, %v1311, %v1313
        %v1316 = vsel %vm1314, %v1313, %v1311
        %vm1317 = vmand %vm1270, %vm1276
        %vm1318 = vmand %vm1271, %vm1277
        %v1319 = vsel %vm1317, 1, 0
        %v1320 = vsel %vm1318, 1, 0
        %vm1321 = vcmp.eq.s32.totalorder %v1319, 1
        %vm1322 = vcmp.eq.s32.totalorder %v1320, 1
        %v1323 = vsel %vm1321, %v1316, 0.0
        %v1324 = vsel %vm1322, %v1315, 0.0
        %v1325 = vadd.f32 %v1308, %v1323
        %v1326 = vadd.f32 %v1309, %v1324
        %1327 = vrot.lane.b32.xlu0 %v1211, 1
        %v1328 = vpop.permute.xlu0 %1327
        %1329 = vrot.lane.b32.xlu0 %v1213, 1
        %v1330 = vpop.permute.xlu0 %1329
        %vm1331 = vcmp.lt.s32.totalorder %v1244, 1
        %v1332 = vsel %vm1331, %v1328, %v1330
        %v1333 = vsel %vm1331, %v1330, %v1328
        %v1334 = vsel %vm1274, 1, 0
        %v1335 = vsel %vm1275, 1, 0
        %vm1336 = vcmp.eq.s32.totalorder %v1334, 1
        %vm1337 = vcmp.eq.s32.totalorder %v1335, 1
        %v1338 = vsel %vm1336, %v1333, 0.0
        %v1339 = vsel %vm1337, %v1332, 0.0
        %v1340 = vadd.f32 %v1325, %v1338
        %v1341 = vadd.f32 %v1326, %v1339
        %1342 = vrot.lane.b32.xlu0 %v1221, 127
        %v1343 = vpop.permute.xlu0 %1342
        %1344 = vrot.lane.b32.xlu0 %v1223, 127
        %v1345 = vpop.permute.xlu0 %1344
        %vm1346 = vcmp.lt.s32.totalorder %v1244, 127
        %v1347 = vsel %vm1346, %v1343, %v1345
        %v1348 = vsel %vm1346, %v1345, %v1343
        %v1349 = vsel %vm1276, 1, 0
        %v1350 = vsel %vm1277, 1, 0
        %vm1351 = vcmp.eq.s32.totalorder %v1349, 1
        %vm1352 = vcmp.eq.s32.totalorder %v1350, 1
        %v1353 = vsel %vm1351, %v1347, 0.0
        %v1354 = vsel %vm1352, %v1348, 0.0
        %v1355 = vadd.f32 %v1340, %v1353
        %v1356 = vadd.f32 %v1341, %v1354
        %1357 = vrot.lane.b32.xlu0 %v1227, 113
        %v1358 = vpop.permute.xlu0 %1357
        %1359 = vrot.lane.b32.xlu0 %v1229, 113
        %v1360 = vpop.permute.xlu0 %1359
        %vm1361 = vcmp.lt.s32.totalorder %v1244, 113
        %v1362 = vsel %vm1361, %v1358, %v1360
        %v1363 = vsel %vm1361, %v1360, %v1358
        %vm1364 = vmand %vm1272, %vm1274
        %vm1365 = vmand %vm1273, %vm1275
        %v1366 = vsel %vm1364, 1, 0
        %v1367 = vsel %vm1365, 1, 0
        %vm1368 = vcmp.eq.s32.totalorder %v1366, 1
        %vm1369 = vcmp.eq.s32.totalorder %v1367, 1
        %v1370 = vsel %vm1368, %v1362, 0.0
        %v1371 = vsel %vm1369, %v1363, 0.0
        %v1372 = vadd.f32 %v1355, %v1370
        %v1373 = vadd.f32 %v1356, %v1371
        %1374 = vrot.lane.b32.xlu0 %v1231, 112
        %v1375 = vpop.permute.xlu0 %1374
        %1376 = vrot.lane.b32.xlu0 %v1233, 112
        %v1377 = vpop.permute.xlu0 %1376
        %vm1378 = vcmp.lt.s32.totalorder %v1244, 112
        %v1379 = vsel %vm1378, %v1375, %v1377
        %v1380 = vsel %vm1378, %v1377, %v1375
        %v1381 = vsel %vm1272, 1, 0
        %v1382 = vsel %vm1273, 1, 0
        %vm1383 = vcmp.eq.s32.totalorder %v1381, 1
        %vm1384 = vcmp.eq.s32.totalorder %v1382, 1
        %v1385 = vsel %vm1383, %v1379, 0.0
        %v1386 = vsel %vm1384, %v1380, 0.0
        %v1387 = vadd.f32 %v1372, %v1385
        %v1388 = vadd.f32 %v1373, %v1386
        %1389 = vrot.lane.b32.xlu0 %v1237, 111
        %v1390 = vpop.permute.xlu0 %1389
        %1391 = vrot.lane.b32.xlu0 %v1239, 111
        %v1392 = vpop.permute.xlu0 %1391
        %vm1393 = vcmp.lt.s32.totalorder %v1244, 111
        %v1394 = vsel %vm1393, %v1390, %v1392
        %v1395 = vsel %vm1393, %v1392, %v1390
        %vm1396 = vmand %vm1272, %vm1276
        %vm1397 = vmand %vm1273, %vm1277
        %v1398 = vsel %vm1396, 1, 0
        %v1399 = vsel %vm1397, 1, 0
        %vm1400 = vcmp.eq.s32.totalorder %v1398, 1
        %vm1401 = vcmp.eq.s32.totalorder %v1399, 1
        %v1402 = vsel %vm1400, %v1394, 0.0
        %v1403 = vsel %vm1401, %v1395, 0.0
        %v1404 = vadd.f32 %v1387, %v1402
        %v1405 = vadd.f32 %v1388, %v1403
        %v1406 = vld [vmem:[%s6] sm:$0xff]
        %1408 = vset.pattern.permute.xlu0 0
        %1409 = vperm.xlu0 %1408, %v1406
        %v1410 = vpop.permute.xlu0 %1409
        %v1412 = vadd.f32 %v1404, %v1410
        %v1413 = vadd.f32 %v1405, %v1410
        %1414 = vst [vmem:[%s286] sm:$0xff] %v1412
        %1415 = vst [vmem:[%s286 + $0x8] sm:$0xff] %v1413
        %s1416 = sand.u32 %s182, 1
        %s1417 = scalar_lea.sflag [#allocation4], %s1416
        %s1418 = sand.u32 %s182, 1
        %s1419 = smul.addr %s1418, 16
        %s1420 = scalar_lea.vmem [#allocation5], %s1419
        // Predicated region
        $region53: #{tpu_custom_call.1} parent=47 // pred_check
          %p1421 = pneg %p192
        $region54: #{tpu_custom_call.1} parent=47 // pred_check_branch
          %1423 = sbr.rel (%p1421) target = $region56
        $region55: #{tpu_custom_call.1} parent=47 // pred_region
          %s1425 = ssub.s32 256, 256
          %1426 = vsyncadd %s1417, %s1425
          %s1427 = smul.addr %s22, 2
          %s1428 = smul.addr %s1427, 128
          %s1429 = scalar_lea.hbm %s7, %s1428
          %s1431 = sshll.u32 %s1420, 4
          %s1432 = int_to_ptr.vmem [resolvable:$true] %s1431
          %1434 = dma.vmem_to_hbm [thread:$0]  %s1432, 256, %s1429, %s1417
        $region56: #{tpu_custom_call.1} parent=47 // pred_fallthru
          _
      $region48: #{tpu_custom_call.1} parent=5 // pred_fallthru
        _
      %p1435 = scmp.le.s32.totalorder 2, %s17
      // Predicated region
      $region57: #{tpu_custom_call.1} parent=5 // pred_check
        %p1436 = pneg %p1435
      $region58: #{tpu_custom_call.1} parent=5 // pred_check_branch
        %1438 = sbr.rel (%p1436) target = $region60
      $region59: #{tpu_custom_call.1} parent=5 // pred_region
        %s1439 = ssub.s32 %s17, 2
        // Predicated region
        $region61: #{tpu_custom_call.1} parent=59 // pred_check
          %p1440 = pneg %p198
        $region62: #{tpu_custom_call.1} parent=59 // pred_check_branch
          %1442 = sbr.rel (%p1440) target = $region64
        $region63: #{tpu_custom_call.1} parent=59 // pred_region
          %s1443 = sand.u32 %s183, 1
          %s1444 = scalar_lea.sflag [#allocation4], %s1443
          %s1445 = sand.u32 %s183, 1
          %s1446 = smul.addr %s1445, 16
          %s1447 = scalar_lea.vmem [#allocation5], %s1446
          %1448 = dma.done %s1444, 256
        $region64: #{tpu_custom_call.1} parent=59 // pred_fallthru
          _
      $region60: #{tpu_custom_call.1} parent=5 // pred_fallthru
        _
    $region6: #{tpu_custom_call.1} parent=1 // loop_footer
      %s21 = sadd.s32 1, %s17
    $region7: #{tpu_custom_call.1} parent=1 // loop_footer_branch
      %16 = sbr.rel target = $region3
    $region8: #{tpu_custom_call.1} parent=1 // loop_exit
      _
    %1449 = vsyncpa [#allocation3], 1
    %s1450 = scalar_lea.sflag [#allocation3], 1
    %1451 = vsyncpa %s1450, 1
    %1452 = vsyncpa [#allocation4], 1
    %s1453 = scalar_lea.sflag [#allocation4], 1
    %1454 = vsyncpa %s1453, 1

</llo_original>
